<compile_context>
chip_gen: v6e
topology: v6e:2x2x1
jax: 0.10.0
libtpu: 0.0.40
codegen_flags: <defaults>
</compile_context>

<pallas_src>
import functools

import numpy as np

import jax
import jax.numpy as jnp
from jax.experimental import pallas as pl
from jax.experimental.pallas import tpu as pltpu

EPS = 1e-5


# ----------------------------------------------------------------------------
# Hardware-aware compiler params
# ----------------------------------------------------------------------------
@functools.lru_cache(maxsize=None)
def _vmem_limit_bytes():
    # ~3/4 of physical VMEM, capped at 96 MiB: 96 MiB on the 128 MiB parts
    # (v5e/v6e), 48 MiB on v7x's 64 MiB, conservative 48 MiB fallback.
    try:
        cap = int(pltpu.get_tpu_info().vmem_capacity_bytes)
    except Exception:
        cap = 0
    if cap <= 0:
        cap = 64 * 1024 * 1024
    return int(min(cap * 3 // 4, 96 * 1024 * 1024))


def _cparams():
    return pltpu.CompilerParams(
        dimension_semantics=("parallel",),
        vmem_limit_bytes=_vmem_limit_bytes())


# ----------------------------------------------------------------------------
# BN helpers (wrapper side)
# ----------------------------------------------------------------------------
def _fold_bn(mean, var, gamma, beta):
    scale = gamma * jax.lax.rsqrt(var + EPS)
    shift = beta - mean * scale
    return scale, shift


def _combine_stats(st, count_per_tile):
    """Parallel-variance combine of per-image (sum, centered-M2) partials.

    st: (T, C, 2); every tile holds exactly `count_per_tile` values/channel.
    Returns (mean, biased variance) per channel over all T*count values."""
    s = st[:, :, 0]                                        # (T, C)
    m2 = st[:, :, 1]                                       # (T, C)
    n = float(count_per_tile)
    total = n * st.shape[0]
    tile_mean = s / n
    grand_mean = jnp.sum(s, axis=0) / total
    var = (jnp.sum(m2, axis=0)
           + n * jnp.sum((tile_mean - grand_mean[None, :]) ** 2, axis=0)) / total
    return grand_mean, var


def _write_stats(st_ref, y):
    """Per-block BN partials of y (C, S): sum and M2 centered on the block mean."""
    s = jnp.sum(y, axis=1, keepdims=True)                  # (C, 1), XLU lane reduce
    d = y - s * (1.0 / y.shape[1])
    m2 = jnp.sum(d * d, axis=1, keepdims=True)             # (C, 1)
    st_ref[0, :, 0:1] = s
    st_ref[0, :, 1:2] = m2


# ----------------------------------------------------------------------------
# Kernels A / C: 1x1 conv as (Cout, Cin) @ (Cin, S) MXU matmul per image,
# optional fused BN-affine + ReLU prologue, bias, BN partials of the output.
# ----------------------------------------------------------------------------
def _conv1x1_kernel(*refs, prologue):
    if prologue:
        x_ref, scale_ref, shift_ref, w_ref, b_ref, y_ref, st_ref = refs
    else:
        x_ref, w_ref, b_ref, y_ref, st_ref = refs

    a = x_ref[0].astype(jnp.float32)                       # (Cin, S)
    if prologue:                                           # fused bn affine + relu
        a = jnp.maximum(a * scale_ref[...] + shift_ref[...], 0.0)

    y = jnp.dot(w_ref[...], a.astype(jnp.bfloat16),        # (Cout, S), MXU
                preferred_element_type=jnp.float32) + b_ref[...]
    y_store = y.astype(y_ref.dtype)
    y_ref[0] = y_store
    # BN partials on exactly the values stored, so the consumer's affine
    # normalizes what it actually reads.
    _write_stats(st_ref, y_store.astype(jnp.float32))


def conv1x1_bn_stats(x, w_bf16, b, scale=None, shift=None, out_dtype=jnp.bfloat16):
    """y = w @ [relu(x*scale+shift) if scale is given else x] + b  per image,
    plus per-image BN partials of y.  x: (N, Cin, S) channel-major."""
    N, Cin, S = x.shape
    Cout = w_bf16.shape[0]
    prologue = scale is not None

    inputs = [x]
    in_specs = [pl.BlockSpec((1, Cin, S), lambda n: (n, 0, 0))]
    if prologue:
        inputs += [scale.reshape(Cin, 1), shift.reshape(Cin, 1)]
        in_specs += [pl.BlockSpec((Cin, 1), lambda n: (0, 0)),
                     pl.BlockSpec((Cin, 1), lambda n: (0, 0))]
    inputs += [w_bf16, b.reshape(Cout, 1)]
    in_specs += [pl.BlockSpec((Cout, Cin), lambda n: (0, 0)),
                 pl.BlockSpec((Cout, 1), lambda n: (0, 0))]

    y, st = pl.pallas_call(
        functools.partial(_conv1x1_kernel, prologue=prologue),
        out_shape=(jax.ShapeDtypeStruct((N, Cout, S), out_dtype),
                   jax.ShapeDtypeStruct((N, Cout, 2), jnp.float32)),
        grid=(N,),
        in_specs=in_specs,
        out_specs=(pl.BlockSpec((1, Cout, S), lambda n: (n, 0, 0)),
                   pl.BlockSpec((1, Cout, 2), lambda n: (n, 0, 0))),
        compiler_params=_cparams(),
    )(*inputs)
    return y, st


# ----------------------------------------------------------------------------
# Kernel B: fused bn1+ReLU prologue + 3x3 conv (pad=1, stride=1) as 9
# accumulated MXU matmuls over lane-rolled taps, bias, BN partials of y2.
# ----------------------------------------------------------------------------
def _spatial_shift(a, d):
    """out[:, p] = a[:, (p + d) % S]; wrapped lanes are zeroed by the caller's mask."""
    if d == 0:
        return a
    S = a.shape[-1]
    return pltpu.roll(a, shift=(-d) % S, axis=1)           # lane rotation on the XLU


def _conv3x3_kernel(y1_ref, scale_ref, shift_ref, w_ref, b_ref, mask_ref,
                    y2_ref, st_ref, *, W):
    S = y1_ref.shape[2]
    C2 = y2_ref.shape[1]
    # Fused bn1 affine + ReLU prologue (f32).  conv2's zero padding acts on this
    # activation, which is exactly what the boundary masks implement below.
    a = jnp.maximum(y1_ref[0].astype(jnp.float32) * scale_ref[...] + shift_ref[...],
                    0.0)                                    # (C1, S)

    acc = jnp.zeros((C2, S), jnp.float32)
    for dy in range(3):
        for dx in range(3):
            t = dy * 3 + dx
            d = (dy - 1) * W + (dx - 1)                     # flat spatial offset
            tap = _spatial_shift(a, d) * mask_ref[t:t + 1, :]
            acc = acc + jnp.dot(w_ref[t], tap.astype(jnp.bfloat16),
                                preferred_element_type=jnp.float32)
    y2 = acc + b_ref[...]
    y2_store = y2.astype(y2_ref.dtype)
    y2_ref[0] = y2_store
    _write_stats(st_ref, y2_store.astype(jnp.float32))


def _conv3x3_tap_masks(H, W):
    """0/1 masks (9, H*W): tap t = dy*3+dx is in-bounds at flat position (y, x)."""
    yy, xx = np.meshgrid(np.arange(H), np.arange(W), indexing="ij")
    yy, xx = yy.reshape(-1), xx.reshape(-1)
    masks = np.zeros((9, H * W), np.float32)
    for dy in range(3):
        for dx in range(3):
            ok = ((yy + dy - 1 >= 0) & (yy + dy - 1 < H)
                  & (xx + dx - 1 >= 0) & (xx + dx - 1 < W))
            masks[dy * 3 + dx] = ok
    return jnp.asarray(masks)


def conv3x3_bn_stats(y1, W, scale1, shift1, w_taps_bf16, b2, tap_mask):
    """relu(bn1(y1)) -> 3x3 conv (pad=1, stride=1), one image per grid step."""
    N, C1, S = y1.shape
    C2 = w_taps_bf16.shape[1]
    y2, st = pl.pallas_call(
        functools.partial(_conv3x3_kernel, W=W),
        out_shape=(jax.ShapeDtypeStruct((N, C2, S), jnp.bfloat16),
                   jax.ShapeDtypeStruct((N, C2, 2), jnp.float32)),
        grid=(N,),
        in_specs=[
            pl.BlockSpec((1, C1, S), lambda n: (n, 0, 0)),
            pl.BlockSpec((C1, 1), lambda n: (0, 0)),
            pl.BlockSpec((C1, 1), lambda n: (0, 0)),
            pl.BlockSpec((9, C2, C1), lambda n: (0, 0, 0)),
            pl.BlockSpec((C2, 1), lambda n: (0, 0)),
            pl.BlockSpec((9, S), lambda n: (0, 0)),
        ],
        out_specs=(pl.BlockSpec((1, C2, S), lambda n: (n, 0, 0)),
                   pl.BlockSpec((1, C2, 2), lambda n: (n, 0, 0))),
        compiler_params=_cparams(),
    )(y1, scale1.reshape(C1, 1), shift1.reshape(C1, 1),
      w_taps_bf16, b2.reshape(C2, 1), tap_mask)
    return y2, st


# ----------------------------------------------------------------------------
# Kernel D: bn3 affine + residual add + ReLU, aliased in place over y3.
# ----------------------------------------------------------------------------
def _bn_add_relu_kernel(y_ref, scale_ref, shift_ref, id_ref, o_ref):
    o_ref[0] = jnp.maximum(
        y_ref[0] * scale_ref[...] + shift_ref[...] + id_ref[0], 0.0)


def bn_add_relu(y3, scale, shift, identity):
    N, C, S = y3.shape
    return pl.pallas_call(
        _bn_add_relu_kernel,
        out_shape=jax.ShapeDtypeStruct((N, C, S), jnp.float32),
        grid=(N,),
        in_specs=[pl.BlockSpec((1, C, S), lambda n: (n, 0, 0)),
                  pl.BlockSpec((C, 1), lambda n: (0, 0)),
                  pl.BlockSpec((C, 1), lambda n: (0, 0)),
                  pl.BlockSpec((1, C, S), lambda n: (n, 0, 0))],
        out_specs=pl.BlockSpec((1, C, S), lambda n: (n, 0, 0)),
        input_output_aliases={0: 0},
        compiler_params=_cparams(),
    )(y3, scale.reshape(C, 1), shift.reshape(C, 1), identity)


# ----------------------------------------------------------------------------
# Block forward
# ----------------------------------------------------------------------------
def block_forward(x_nchw, params, stride=1, identity_downsample=None):
    if identity_downsample is not None:
        # TODO(synk): identity_downsample (strided 1x1 conv + BN on the skip
        # path) not implemented; the tested configuration passes None.
        raise NotImplementedError("identity_downsample path not implemented")
    if stride != 1:
        # TODO(synk): stride > 1 for conv2 (strided tap masks + subsampled
        # output indexing); not exercised by the test configuration.
        raise NotImplementedError("conv2 stride > 1 not implemented")

    N, Cin, H, W = x_nchw.shape
    S = H * W
    # NCHW is kept; spatial is flattened onto the lane axis (free reshape).
    x = x_nchw.reshape(N, Cin, S).astype(jnp.float32)

    C1 = params["w1"].shape[0]
    C2 = params["w2"].shape[0]
    C3 = params["w3"].shape[0]
    w1 = params["w1"].reshape(C1, Cin).astype(jnp.bfloat16)               # (C1, Cin)
    w2 = jnp.transpose(params["w2"], (2, 3, 0, 1)).reshape(9, C2, C1).astype(jnp.bfloat16)
    w3 = params["w3"].reshape(C3, C2).astype(jnp.bfloat16)                # (C3, C2)
    tap_mask = _conv3x3_tap_masks(H, W)                                   # (9, S) const

    # A) conv1 (1x1) -> raw y1 (bf16) + bn1 partials
    y1, st1 = conv1x1_bn_stats(x, w1, params["b1"], out_dtype=jnp.bfloat16)
    mean1, var1 = _combine_stats(st1, S)
    scale1, shift1 = _fold_bn(mean1, var1, params["g1"], params["be1"])

    # B) fused bn1+relu -> conv2 (3x3, pad=1) -> raw y2 (bf16) + bn2 partials
    y2, st2 = conv3x3_bn_stats(y1, W, scale1, shift1, w2, params["b2"], tap_mask)
    mean2, var2 = _combine_stats(st2, S)
    scale2, shift2 = _fold_bn(mean2, var2, params["g2"], params["be2"])

    # C) fused bn2+relu -> conv3 (1x1) -> raw y3 (f32) + bn3 partials
    y3, st3 = conv1x1_bn_stats(y2, w3, params["b3"], scale2, shift2,
                               out_dtype=jnp.float32)
    mean3, var3 = _combine_stats(st3, S)
    scale3, shift3 = _fold_bn(mean3, var3, params["g3"], params["be3"])

    # D) bn3 affine + residual add + relu (in place over y3)
    out = bn_add_relu(y3, scale3, shift3, x)
    return out.reshape(N, C3, H, W)


# ----------------------------------------------------------------------------
# Pure-JAX references (for correctness check)
# ----------------------------------------------------------------------------
def _ref_conv(x, w, b, stride, pad, dot_dtype):
    y = jax.lax.conv_general_dilated(
        x.astype(dot_dtype), w.astype(dot_dtype), (stride, stride),
        [(pad, pad), (pad, pad)],
        dimension_numbers=("NCHW", "OIHW", "NCHW"),
        preferred_element_type=jnp.float32)
    return y + b[None, :, None, None]


def _ref_bn(x, gamma, beta):
    mean = x.mean(axis=(0, 2, 3), keepdims=True)
    var = x.var(axis=(0, 2, 3), keepdims=True)
    return (x - mean) / jnp.sqrt(var + EPS) * gamma[None, :, None, None] \
        + beta[None, :, None, None]


def block_forward_ref(x, p, stride=1, dot_dtype=jnp.float32):
    identity = x
    y = jax.nn.relu(_ref_bn(_ref_conv(x, p["w1"], p["b1"], 1, 0, dot_dtype), p["g1"], p["be1"]))
    y = jax.nn.relu(_ref_bn(_ref_conv(y, p["w2"], p["b2"], stride, 1, dot_dtype), p["g2"], p["be2"]))
    y = _ref_bn(_ref_conv(y, p["w3"], p["b3"], 1, 0, dot_dtype), p["g3"], p["be3"])
    return jax.nn.relu(y + identity)


# ----------------------------------------------------------------------------
# Main
# ----------------------------------------------------------------------------
if __name__ == "__main__":
    key = jax.random.PRNGKey(0)
    N, H, W = 2, 16, 16
    out_channels = 4
    expansion = 4
    in_channels = out_channels * expansion   # 16, so identity_downsample=None works
    stride = 1

    ks = jax.random.split(key, 8)
    params = {
        "w1": 0.1 * jax.random.normal(ks[0], (out_channels, in_channels, 1, 1), jnp.float32),
        "b1": 0.1 * jax.random.normal(ks[1], (out_channels,), jnp.float32),
        "g1": jnp.ones((out_channels,), jnp.float32),
        "be1": jnp.zeros((out_channels,), jnp.float32),
        "w2": 0.1 * jax.random.normal(ks[2], (out_channels, out_channels, 3, 3), jnp.float32),
        "b2": 0.1 * jax.random.normal(ks[3], (out_channels,), jnp.float32),
        "g2": jnp.ones((out_channels,), jnp.float32),
        "be2": jnp.zeros((out_channels,), jnp.float32),
        "w3": 0.1 * jax.random.normal(ks[4], (out_channels * expansion, out_channels, 1, 1), jnp.float32),
        "b3": 0.1 * jax.random.normal(ks[5], (out_channels * expansion,), jnp.float32),
        "g3": jnp.ones((out_channels * expansion,), jnp.float32),
        "be3": jnp.zeros((out_channels * expansion,), jnp.float32),
    }

    x = jax.random.normal(ks[6], (N, in_channels, H, W), jnp.float32)

    fwd = jax.jit(functools.partial(block_forward, stride=stride, identity_downsample=None))
    out = jax.block_until_ready(fwd(x, params))
    assert out.shape == (N, out_channels * expansion, H, W)

    # References: same bf16 MXU operands / f32 accumulate, and pure-f32
    # (PyTorch-equivalent).  bf16 HBM storage of y1/y2 puts ~2^-9 relative
    # rounding ahead of the BN 1/sigma amplification, so tolerances are a few
    # e-2 rather than the f32-intermediate 5e-3.
    ref_bf16 = jax.block_until_ready(block_forward_ref(x, params, stride, jnp.bfloat16))
    ref_f32 = jax.block_until_ready(block_forward_ref(x, params, stride, jnp.float32))
    err_bf16 = float(jnp.max(jnp.abs(out - ref_bf16)))
    err_f32 = float(jnp.max(jnp.abs(out - ref_f32)))
    assert err_bf16 < 5e-2, f"max err vs bf16 reference: {err_bf16}"
    assert err_f32 < 8e-2, f"max err vs f32 reference: {err_f32}"

    print("KERNEL_OK")
</pallas_src>

<mosaic_0001>
module attributes {stable_mosaic.version = 11 : i64} {
  func.func @_conv1x1_kernel(%arg0: i32, %arg1: memref<1x16x256xf32, #tpu.memory_space<vmem>>, %arg2: memref<4x16xbf16, #tpu.memory_space<vmem>>, %arg3: memref<4x1xf32, #tpu.memory_space<vmem>>, %arg4: memref<1x4x256xbf16, #tpu.memory_space<vmem>>, %arg5: memref<1x4x2xf32, #tpu.memory_space<vmem>>) attributes {dimension_semantics = [#tpu.dimension_semantics<parallel>], iteration_bounds = array<i64: 2>, scalar_prefetch = 0 : i64, scratch_operands = 0 : i64, tpu.core_type = #tpu.core_type<tc>, window_params = [{transform_indices = @transform_0, window_bounds = array<i64: 1, 16, 256>}, {pipeline_mode = #tpu.pipeline_mode<synchronous>, transform_indices = @transform_1, window_bounds = array<i64: 4, 16>}, {pipeline_mode = #tpu.pipeline_mode<synchronous>, transform_indices = @transform_2, window_bounds = array<i64: 4, 1>}, {transform_indices = @transform_3, window_bounds = array<i64: 1, 4, 256>}, {transform_indices = @transform_4, window_bounds = array<i64: 1, 4, 2>}]} {
    %c0 = arith.constant 0 : index
    %c0_0 = arith.constant 0 : index
    %c0_1 = arith.constant 0 : index
    %0 = vector.load %arg1[%c0, %c0_0, %c0_1] : memref<1x16x256xf32, #tpu.memory_space<vmem>>, vector<1x16x256xf32>
    %1 = vector.shape_cast %0 : vector<1x16x256xf32> to vector<16x256xf32>
    %c0_2 = arith.constant 0 : index
    %c0_3 = arith.constant 0 : index
    %2 = vector.load %arg2[%c0_2, %c0_3] : memref<4x16xbf16, #tpu.memory_space<vmem>>, vector<4x16xbf16>
    %3 = arith.truncf %1 : vector<16x256xf32> to vector<16x256xbf16>
    %cst = arith.constant dense<0.000000e+00> : vector<4x256xf32>
    %4 = tpu.matmul %2, %3, %cst {dimension_numbers = #tpu.dot_dimension_numbers<[1], [0], [0], [1], [0, 0, 1, 1], [], []>} : vector<4x16xbf16>, vector<16x256xbf16>, vector<4x256xf32> -> vector<4x256xf32>
    %c0_4 = arith.constant 0 : index
    %c0_5 = arith.constant 0 : index
    %5 = vector.load %arg3[%c0_4, %c0_5] : memref<4x1xf32, #tpu.memory_space<vmem>>, vector<4x1xf32>
    %6 = vector.broadcast %5 : vector<4x1xf32> to vector<4x256xf32>
    %7 = arith.addf %4, %6 : vector<4x256xf32>
    %8 = arith.truncf %7 : vector<4x256xf32> to vector<4x256xbf16>
    %c0_6 = arith.constant 0 : index
    %c0_7 = arith.constant 0 : index
    %c0_8 = arith.constant 0 : index
    %9 = vector.load %arg4[%c0_6, %c0_7, %c0_8] : memref<1x4x256xbf16, #tpu.memory_space<vmem>>, vector<1x4x256xbf16>
    %10 = vector.shape_cast %9 : vector<1x4x256xbf16> to vector<4x256xbf16>
    %11 = vector.shape_cast %8 : vector<4x256xbf16> to vector<1x4x256xbf16>
    tpu.vector_store %arg4[%c0_6, %c0_7, %c0_8], %11 {strides = array<i32>} : memref<1x4x256xbf16, #tpu.memory_space<vmem>>, vector<1x4x256xbf16>,
    %12 = arith.extf %8 : vector<4x256xbf16> to vector<4x256xf32>
    %cst_9 = arith.constant dense<0.000000e+00> : vector<4xf32>
    %13 = vector.multi_reduction <add>, %12, %cst_9 [1] : vector<4x256xf32> to vector<4xf32>
    %14 = vector.shape_cast %13 : vector<4xf32> to vector<4x1xf32>
    %cst_10 = arith.constant 3.906250e-03 : f32
    %15 = vector.broadcast %cst_10 : f32 to vector<4x1xf32>
    %16 = arith.mulf %14, %15 : vector<4x1xf32>
    %17 = vector.broadcast %16 : vector<4x1xf32> to vector<4x256xf32>
    %18 = arith.subf %12, %17 : vector<4x256xf32>
    %19 = arith.mulf %18, %18 : vector<4x256xf32>
    %cst_11 = arith.constant dense<0.000000e+00> : vector<4xf32>
    %20 = vector.multi_reduction <add>, %19, %cst_11 [1] : vector<4x256xf32> to vector<4xf32>
    %21 = vector.shape_cast %20 : vector<4xf32> to vector<4x1xf32>
    %c0_12 = arith.constant 0 : index
    %c0_13 = arith.constant 0 : index
    %c0_14 = arith.constant 0 : index
    %22 = vector.load %arg5[%c0_12, %c0_13, %c0_14] : memref<1x4x2xf32, #tpu.memory_space<vmem>>, vector<1x4x1xf32>
    %23 = vector.shape_cast %22 : vector<1x4x1xf32> to vector<4x1xf32>
    %24 = vector.shape_cast %14 : vector<4x1xf32> to vector<1x4x1xf32>
    tpu.vector_store %arg5[%c0_12, %c0_13, %c0_14], %24 {strides = array<i32>} : memref<1x4x2xf32, #tpu.memory_space<vmem>>, vector<1x4x1xf32>,
    %c0_15 = arith.constant 0 : index
    %c0_16 = arith.constant 0 : index
    %c1 = arith.constant 1 : index
    %25 = vector.load %arg5[%c0_15, %c0_16, %c1] : memref<1x4x2xf32, #tpu.memory_space<vmem>>, vector<1x4x1xf32>
    %26 = vector.shape_cast %25 : vector<1x4x1xf32> to vector<4x1xf32>
    %27 = vector.shape_cast %21 : vector<4x1xf32> to vector<1x4x1xf32>
    tpu.vector_store %arg5[%c0_15, %c0_16, %c1], %27 {strides = array<i32>} : memref<1x4x2xf32, #tpu.memory_space<vmem>>, vector<1x4x1xf32>,
    return
  }
  func.func @transform_0(%arg0: i32) -> (i32, i32, i32) {
    %c0_i32 = arith.constant 0 : i32
    %c0_i32_0 = arith.constant 0 : i32
    %c0_i32_1 = arith.constant 0 : i32
    return %arg0, %c0_i32, %c0_i32_0 : i32, i32, i32
  }
  func.func @transform_1(%arg0: i32) -> (i32, i32) {
    %c0_i32 = arith.constant 0 : i32
    %c0_i32_0 = arith.constant 0 : i32
    %c0_i32_1 = arith.constant 0 : i32
    return %c0_i32, %c0_i32_0 : i32, i32
  }
  func.func @transform_2(%arg0: i32) -> (i32, i32) {
    %c0_i32 = arith.constant 0 : i32
    %c0_i32_0 = arith.constant 0 : i32
    %c0_i32_1 = arith.constant 0 : i32
    return %c0_i32, %c0_i32_0 : i32, i32
  }
  func.func @transform_3(%arg0: i32) -> (i32, i32, i32) {
    %c0_i32 = arith.constant 0 : i32
    %c0_i32_0 = arith.constant 0 : i32
    %c0_i32_1 = arith.constant 0 : i32
    return %arg0, %c0_i32, %c0_i32_0 : i32, i32, i32
  }
  func.func @transform_4(%arg0: i32) -> (i32, i32, i32) {
    %c0_i32 = arith.constant 0 : i32
    %c0_i32_0 = arith.constant 0 : i32
    %c0_i32_1 = arith.constant 0 : i32
    return %arg0, %c0_i32, %c0_i32_0 : i32, i32, i32
  }
}

module attributes {stable_mosaic.version = 11 : i64} {
  func.func @_conv1x1_kernel(%arg0: i32, %arg1: memref<1x4x256xbf16, #tpu.memory_space<vmem>>, %arg2: memref<4x1xf32, #tpu.memory_space<vmem>>, %arg3: memref<4x1xf32, #tpu.memory_space<vmem>>, %arg4: memref<16x4xbf16, #tpu.memory_space<vmem>>, %arg5: memref<16x1xf32, #tpu.memory_space<vmem>>, %arg6: memref<1x16x256xf32, #tpu.memory_space<vmem>>, %arg7: memref<1x16x2xf32, #tpu.memory_space<vmem>>) attributes {dimension_semantics = [#tpu.dimension_semantics<parallel>], iteration_bounds = array<i64: 2>, scalar_prefetch = 0 : i64, scratch_operands = 0 : i64, tpu.core_type = #tpu.core_type<tc>, window_params = [{transform_indices = @transform_0, window_bounds = array<i64: 1, 4, 256>}, {pipeline_mode = #tpu.pipeline_mode<synchronous>, transform_indices = @transform_1, window_bounds = array<i64: 4, 1>}, {pipeline_mode = #tpu.pipeline_mode<synchronous>, transform_indices = @transform_2, window_bounds = array<i64: 4, 1>}, {pipeline_mode = #tpu.pipeline_mode<synchronous>, transform_indices = @transform_3, window_bounds = array<i64: 16, 4>}, {pipeline_mode = #tpu.pipeline_mode<synchronous>, transform_indices = @transform_4, window_bounds = array<i64: 16, 1>}, {transform_indices = @transform_5, window_bounds = array<i64: 1, 16, 256>}, {transform_indices = @transform_6, window_bounds = array<i64: 1, 16, 2>}]} {
    %c0 = arith.constant 0 : index
    %c0_0 = arith.constant 0 : index
    %c0_1 = arith.constant 0 : index
    %0 = vector.load %arg1[%c0, %c0_0, %c0_1] : memref<1x4x256xbf16, #tpu.memory_space<vmem>>, vector<1x4x256xbf16>
    %1 = vector.shape_cast %0 : vector<1x4x256xbf16> to vector<4x256xbf16>
    %2 = arith.extf %1 : vector<4x256xbf16> to vector<4x256xf32>
    %c0_2 = arith.constant 0 : index
    %c0_3 = arith.constant 0 : index
    %3 = vector.load %arg2[%c0_2, %c0_3] : memref<4x1xf32, #tpu.memory_space<vmem>>, vector<4x1xf32>
    %4 = vector.broadcast %3 : vector<4x1xf32> to vector<4x256xf32>
    %5 = arith.mulf %2, %4 : vector<4x256xf32>
    %c0_4 = arith.constant 0 : index
    %c0_5 = arith.constant 0 : index
    %6 = vector.load %arg3[%c0_4, %c0_5] : memref<4x1xf32, #tpu.memory_space<vmem>>, vector<4x1xf32>
    %7 = vector.broadcast %6 : vector<4x1xf32> to vector<4x256xf32>
    %8 = arith.addf %5, %7 : vector<4x256xf32>
    %cst = arith.constant 0.000000e+00 : f32
    %9 = vector.broadcast %cst : f32 to vector<4x256xf32>
    %10 = arith.maximumf %8, %9 : vector<4x256xf32>
    %c0_6 = arith.constant 0 : index
    %c0_7 = arith.constant 0 : index
    %11 = vector.load %arg4[%c0_6, %c0_7] : memref<16x4xbf16, #tpu.memory_space<vmem>>, vector<16x4xbf16>
    %12 = arith.truncf %10 : vector<4x256xf32> to vector<4x256xbf16>
    %cst_8 = arith.constant dense<0.000000e+00> : vector<16x256xf32>
    %13 = tpu.matmul %11, %12, %cst_8 {dimension_numbers = #tpu.dot_dimension_numbers<[1], [0], [0], [1], [0, 0, 1, 1], [], []>} : vector<16x4xbf16>, vector<4x256xbf16>, vector<16x256xf32> -> vector<16x256xf32>
    %c0_9 = arith.constant 0 : index
    %c0_10 = arith.constant 0 : index
    %14 = vector.load %arg5[%c0_9, %c0_10] : memref<16x1xf32, #tpu.memory_space<vmem>>, vector<16x1xf32>
    %15 = vector.broadcast %14 : vector<16x1xf32> to vector<16x256xf32>
    %16 = arith.addf %13, %15 : vector<16x256xf32>
    %c0_11 = arith.constant 0 : index
    %c0_12 = arith.constant 0 : index
    %c0_13 = arith.constant 0 : index
    %17 = vector.load %arg6[%c0_11, %c0_12, %c0_13] : memref<1x16x256xf32, #tpu.memory_space<vmem>>, vector<1x16x256xf32>
    %18 = vector.shape_cast %17 : vector<1x16x256xf32> to vector<16x256xf32>
    %19 = vector.shape_cast %16 : vector<16x256xf32> to vector<1x16x256xf32>
    tpu.vector_store %arg6[%c0_11, %c0_12, %c0_13], %19 {strides = array<i32>} : memref<1x16x256xf32, #tpu.memory_space<vmem>>, vector<1x16x256xf32>,
    %cst_14 = arith.constant dense<0.000000e+00> : vector<16xf32>
    %20 = vector.multi_reduction <add>, %16, %cst_14 [1] : vector<16x256xf32> to vector<16xf32>
    %21 = vector.shape_cast %20 : vector<16xf32> to vector<16x1xf32>
    %cst_15 = arith.constant 3.906250e-03 : f32
    %22 = vector.broadcast %cst_15 : f32 to vector<16x1xf32>
    %23 = arith.mulf %21, %22 : vector<16x1xf32>
    %24 = vector.broadcast %23 : vector<16x1xf32> to vector<16x256xf32>
    %25 = arith.subf %16, %24 : vector<16x256xf32>
    %26 = arith.mulf %25, %25 : vector<16x256xf32>
    %cst_16 = arith.constant dense<0.000000e+00> : vector<16xf32>
    %27 = vector.multi_reduction <add>, %26, %cst_16 [1] : vector<16x256xf32> to vector<16xf32>
    %28 = vector.shape_cast %27 : vector<16xf32> to vector<16x1xf32>
    %c0_17 = arith.constant 0 : index
    %c0_18 = arith.constant 0 : index
    %c0_19 = arith.constant 0 : index
    %29 = vector.load %arg7[%c0_17, %c0_18, %c0_19] : memref<1x16x2xf32, #tpu.memory_space<vmem>>, vector<1x16x1xf32>
    %30 = vector.shape_cast %29 : vector<1x16x1xf32> to vector<16x1xf32>
    %31 = vector.shape_cast %21 : vector<16x1xf32> to vector<1x16x1xf32>
    tpu.vector_store %arg7[%c0_17, %c0_18, %c0_19], %31 {strides = array<i32>} : memref<1x16x2xf32, #tpu.memory_space<vmem>>, vector<1x16x1xf32>,
    %c0_20 = arith.constant 0 : index
    %c0_21 = arith.constant 0 : index
    %c1 = arith.constant 1 : index
    %32 = vector.load %arg7[%c0_20, %c0_21, %c1] : memref<1x16x2xf32, #tpu.memory_space<vmem>>, vector<1x16x1xf32>
    %33 = vector.shape_cast %32 : vector<1x16x1xf32> to vector<16x1xf32>
    %34 = vector.shape_cast %28 : vector<16x1xf32> to vector<1x16x1xf32>
    tpu.vector_store %arg7[%c0_20, %c0_21, %c1], %34 {strides = array<i32>} : memref<1x16x2xf32, #tpu.memory_space<vmem>>, vector<1x16x1xf32>,
    return
  }
  func.func @transform_0(%arg0: i32) -> (i32, i32, i32) {
    %c0_i32 = arith.constant 0 : i32
    %c0_i32_0 = arith.constant 0 : i32
    %c0_i32_1 = arith.constant 0 : i32
    return %arg0, %c0_i32, %c0_i32_0 : i32, i32, i32
  }
  func.func @transform_1(%arg0: i32) -> (i32, i32) {
    %c0_i32 = arith.constant 0 : i32
    %c0_i32_0 = arith.constant 0 : i32
    %c0_i32_1 = arith.constant 0 : i32
    return %c0_i32, %c0_i32_0 : i32, i32
  }
  func.func @transform_2(%arg0: i32) -> (i32, i32) {
    %c0_i32 = arith.constant 0 : i32
    %c0_i32_0 = arith.constant 0 : i32
    %c0_i32_1 = arith.constant 0 : i32
    return %c0_i32, %c0_i32_0 : i32, i32
  }
  func.func @transform_3(%arg0: i32) -> (i32, i32) {
    %c0_i32 = arith.constant 0 : i32
    %c0_i32_0 = arith.constant 0 : i32
    %c0_i32_1 = arith.constant 0 : i32
    return %c0_i32, %c0_i32_0 : i32, i32
  }
  func.func @transform_4(%arg0: i32) -> (i32, i32) {
    %c0_i32 = arith.constant 0 : i32
    %c0_i32_0 = arith.constant 0 : i32
    %c0_i32_1 = arith.constant 0 : i32
    return %c0_i32, %c0_i32_0 : i32, i32
  }
  func.func @transform_5(%arg0: i32) -> (i32, i32, i32) {
    %c0_i32 = arith.constant 0 : i32
    %c0_i32_0 = arith.constant 0 : i32
    %c0_i32_1 = arith.constant 0 : i32
    return %arg0, %c0_i32, %c0_i32_0 : i32, i32, i32
  }
  func.func @transform_6(%arg0: i32) -> (i32, i32, i32) {
    %c0_i32 = arith.constant 0 : i32
    %c0_i32_0 = arith.constant 0 : i32
    %c0_i32_1 = arith.constant 0 : i32
    return %arg0, %c0_i32, %c0_i32_0 : i32, i32, i32
  }
}

module attributes {stable_mosaic.version = 11 : i64} {
  func.func @_conv3x3_kernel(%arg0: i32, %arg1: memref<1x4x256xbf16, #tpu.memory_space<vmem>>, %arg2: memref<4x1xf32, #tpu.memory_space<vmem>>, %arg3: memref<4x1xf32, #tpu.memory_space<vmem>>, %arg4: memref<9x4x4xbf16, #tpu.memory_space<vmem>>, %arg5: memref<4x1xf32, #tpu.memory_space<vmem>>, %arg6: memref<9x256xf32, #tpu.memory_space<vmem>>, %arg7: memref<1x4x256xbf16, #tpu.memory_space<vmem>>, %arg8: memref<1x4x2xf32, #tpu.memory_space<vmem>>) attributes {dimension_semantics = [#tpu.dimension_semantics<parallel>], iteration_bounds = array<i64: 2>, scalar_prefetch = 0 : i64, scratch_operands = 0 : i64, tpu.core_type = #tpu.core_type<tc>, window_params = [{transform_indices = @transform_0, window_bounds = array<i64: 1, 4, 256>}, {pipeline_mode = #tpu.pipeline_mode<synchronous>, transform_indices = @transform_1, window_bounds = array<i64: 4, 1>}, {pipeline_mode = #tpu.pipeline_mode<synchronous>, transform_indices = @transform_2, window_bounds = array<i64: 4, 1>}, {pipeline_mode = #tpu.pipeline_mode<synchronous>, transform_indices = @transform_3, window_bounds = array<i64: 9, 4, 4>}, {pipeline_mode = #tpu.pipeline_mode<synchronous>, transform_indices = @transform_4, window_bounds = array<i64: 4, 1>}, {pipeline_mode = #tpu.pipeline_mode<synchronous>, transform_indices = @transform_5, window_bounds = array<i64: 9, 256>}, {transform_indices = @transform_6, window_bounds = array<i64: 1, 4, 256>}, {transform_indices = @transform_7, window_bounds = array<i64: 1, 4, 2>}]} {
    %c0 = arith.constant 0 : index
    %c0_0 = arith.constant 0 : index
    %c0_1 = arith.constant 0 : index
    %0 = vector.load %arg1[%c0, %c0_0, %c0_1] : memref<1x4x256xbf16, #tpu.memory_space<vmem>>, vector<1x4x256xbf16>
    %1 = vector.shape_cast %0 : vector<1x4x256xbf16> to vector<4x256xbf16>
    %2 = arith.extf %1 : vector<4x256xbf16> to vector<4x256xf32>
    %c0_2 = arith.constant 0 : index
    %c0_3 = arith.constant 0 : index
    %3 = vector.load %arg2[%c0_2, %c0_3] : memref<4x1xf32, #tpu.memory_space<vmem>>, vector<4x1xf32>
    %4 = vector.broadcast %3 : vector<4x1xf32> to vector<4x256xf32>
    %5 = arith.mulf %2, %4 : vector<4x256xf32>
    %c0_4 = arith.constant 0 : index
    %c0_5 = arith.constant 0 : index
    %6 = vector.load %arg3[%c0_4, %c0_5] : memref<4x1xf32, #tpu.memory_space<vmem>>, vector<4x1xf32>
    %7 = vector.broadcast %6 : vector<4x1xf32> to vector<4x256xf32>
    %8 = arith.addf %5, %7 : vector<4x256xf32>
    %cst = arith.constant 0.000000e+00 : f32
    %9 = vector.broadcast %cst : f32 to vector<4x256xf32>
    %10 = arith.maximumf %8, %9 : vector<4x256xf32>
    %cst_6 = arith.constant 0.000000e+00 : f32
    %11 = vector.broadcast %cst_6 : f32 to vector<4x256xf32>
    %c17_i32 = arith.constant 17 : i32
    %12 = tpu.dynamic_rotate %10 by %c17_i32 dim 1 : vector<4x256xf32>, i32 -> vector<4x256xf32>
    %c0_7 = arith.constant 0 : index
    %c0_8 = arith.constant 0 : index
    %13 = vector.load %arg6[%c0_7, %c0_8] : memref<9x256xf32, #tpu.memory_space<vmem>>, vector<1x256xf32>
    %14 = vector.broadcast %13 : vector<1x256xf32> to vector<4x256xf32>
    %15 = arith.mulf %12, %14 : vector<4x256xf32>
    %c0_9 = arith.constant 0 : index
    %c0_10 = arith.constant 0 : index
    %c0_11 = arith.constant 0 : index
    %16 = vector.load %arg4[%c0_9, %c0_10, %c0_11] : memref<9x4x4xbf16, #tpu.memory_space<vmem>>, vector<1x4x4xbf16>
    %17 = vector.shape_cast %16 : vector<1x4x4xbf16> to vector<4x4xbf16>
    %18 = arith.truncf %15 : vector<4x256xf32> to vector<4x256xbf16>
    %cst_12 = arith.constant dense<0.000000e+00> : vector<4x256xf32>
    %19 = tpu.matmul %17, %18, %cst_12 {dimension_numbers = #tpu.dot_dimension_numbers<[1], [0], [0], [1], [0, 0, 1, 1], [], []>} : vector<4x4xbf16>, vector<4x256xbf16>, vector<4x256xf32> -> vector<4x256xf32>
    %20 = arith.addf %11, %19 : vector<4x256xf32>
    %c16_i32 = arith.constant 16 : i32
    %21 = tpu.dynamic_rotate %10 by %c16_i32 dim 1 : vector<4x256xf32>, i32 -> vector<4x256xf32>
    %c1 = arith.constant 1 : index
    %c0_13 = arith.constant 0 : index
    %22 = vector.load %arg6[%c1, %c0_13] : memref<9x256xf32, #tpu.memory_space<vmem>>, vector<1x256xf32>
    %23 = vector.broadcast %22 : vector<1x256xf32> to vector<4x256xf32>
    %24 = arith.mulf %21, %23 : vector<4x256xf32>
    %c1_14 = arith.constant 1 : index
    %c0_15 = arith.constant 0 : index
    %c0_16 = arith.constant 0 : index
    %25 = vector.load %arg4[%c1_14, %c0_15, %c0_16] : memref<9x4x4xbf16, #tpu.memory_space<vmem>>, vector<1x4x4xbf16>
    %26 = vector.shape_cast %25 : vector<1x4x4xbf16> to vector<4x4xbf16>
    %27 = arith.truncf %24 : vector<4x256xf32> to vector<4x256xbf16>
    %cst_17 = arith.constant dense<0.000000e+00> : vector<4x256xf32>
    %28 = tpu.matmul %26, %27, %cst_17 {dimension_numbers = #tpu.dot_dimension_numbers<[1], [0], [0], [1], [0, 0, 1, 1], [], []>} : vector<4x4xbf16>, vector<4x256xbf16>, vector<4x256xf32> -> vector<4x256xf32>
    %29 = arith.addf %20, %28 : vector<4x256xf32>
    %c15_i32 = arith.constant 15 : i32
    %30 = tpu.dynamic_rotate %10 by %c15_i32 dim 1 : vector<4x256xf32>, i32 -> vector<4x256xf32>
    %c2 = arith.constant 2 : index
    %c0_18 = arith.constant 0 : index
    %31 = vector.load %arg6[%c2, %c0_18] : memref<9x256xf32, #tpu.memory_space<vmem>>, vector<1x256xf32>
    %32 = vector.broadcast %31 : vector<1x256xf32> to vector<4x256xf32>
    %33 = arith.mulf %30, %32 : vector<4x256xf32>
    %c2_19 = arith.constant 2 : index
    %c0_20 = arith.constant 0 : index
    %c0_21 = arith.constant 0 : index
    %34 = vector.load %arg4[%c2_19, %c0_20, %c0_21] : memref<9x4x4xbf16, #tpu.memory_space<vmem>>, vector<1x4x4xbf16>
    %35 = vector.shape_cast %34 : vector<1x4x4xbf16> to vector<4x4xbf16>
    %36 = arith.truncf %33 : vector<4x256xf32> to vector<4x256xbf16>
    %cst_22 = arith.constant dense<0.000000e+00> : vector<4x256xf32>
    %37 = tpu.matmul %35, %36, %cst_22 {dimension_numbers = #tpu.dot_dimension_numbers<[1], [0], [0], [1], [0, 0, 1, 1], [], []>} : vector<4x4xbf16>, vector<4x256xbf16>, vector<4x256xf32> -> vector<4x256xf32>
    %38 = arith.addf %29, %37 : vector<4x256xf32>
    %c1_i32 = arith.constant 1 : i32
    %39 = tpu.dynamic_rotate %10 by %c1_i32 dim 1 : vector<4x256xf32>, i32 -> vector<4x256xf32>
    %c3 = arith.constant 3 : index
    %c0_23 = arith.constant 0 : index
    %40 = vector.load %arg6[%c3, %c0_23] : memref<9x256xf32, #tpu.memory_space<vmem>>, vector<1x256xf32>
    %41 = vector.broadcast %40 : vector<1x256xf32> to vector<4x256xf32>
    %42 = arith.mulf %39, %41 : vector<4x256xf32>
    %c3_24 = arith.constant 3 : index
    %c0_25 = arith.constant 0 : index
    %c0_26 = arith.constant 0 : index
    %43 = vector.load %arg4[%c3_24, %c0_25, %c0_26] : memref<9x4x4xbf16, #tpu.memory_space<vmem>>, vector<1x4x4xbf16>
    %44 = vector.shape_cast %43 : vector<1x4x4xbf16> to vector<4x4xbf16>
    %45 = arith.truncf %42 : vector<4x256xf32> to vector<4x256xbf16>
    %cst_27 = arith.constant dense<0.000000e+00> : vector<4x256xf32>
    %46 = tpu.matmul %44, %45, %cst_27 {dimension_numbers = #tpu.dot_dimension_numbers<[1], [0], [0], [1], [0, 0, 1, 1], [], []>} : vector<4x4xbf16>, vector<4x256xbf16>, vector<4x256xf32> -> vector<4x256xf32>
    %47 = arith.addf %38, %46 : vector<4x256xf32>
    %c4 = arith.constant 4 : index
    %c0_28 = arith.constant 0 : index
    %48 = vector.load %arg6[%c4, %c0_28] : memref<9x256xf32, #tpu.memory_space<vmem>>, vector<1x256xf32>
    %49 = vector.broadcast %48 : vector<1x256xf32> to vector<4x256xf32>
    %50 = arith.mulf %10, %49 : vector<4x256xf32>
    %c4_29 = arith.constant 4 : index
    %c0_30 = arith.constant 0 : index
    %c0_31 = arith.constant 0 : index
    %51 = vector.load %arg4[%c4_29, %c0_30, %c0_31] : memref<9x4x4xbf16, #tpu.memory_space<vmem>>, vector<1x4x4xbf16>
    %52 = vector.shape_cast %51 : vector<1x4x4xbf16> to vector<4x4xbf16>
    %53 = arith.truncf %50 : vector<4x256xf32> to vector<4x256xbf16>
    %cst_32 = arith.constant dense<0.000000e+00> : vector<4x256xf32>
    %54 = tpu.matmul %52, %53, %cst_32 {dimension_numbers = #tpu.dot_dimension_numbers<[1], [0], [0], [1], [0, 0, 1, 1], [], []>} : vector<4x4xbf16>, vector<4x256xbf16>, vector<4x256xf32> -> vector<4x256xf32>
    %55 = arith.addf %47, %54 : vector<4x256xf32>
    %c255_i32 = arith.constant 255 : i32
    %56 = tpu.dynamic_rotate %10 by %c255_i32 dim 1 : vector<4x256xf32>, i32 -> vector<4x256xf32>
    %c5 = arith.constant 5 : index
    %c0_33 = arith.constant 0 : index
    %57 = vector.load %arg6[%c5, %c0_33] : memref<9x256xf32, #tpu.memory_space<vmem>>, vector<1x256xf32>
    %58 = vector.broadcast %57 : vector<1x256xf32> to vector<4x256xf32>
    %59 = arith.mulf %56, %58 : vector<4x256xf32>
    %c5_34 = arith.constant 5 : index
    %c0_35 = arith.constant 0 : index
    %c0_36 = arith.constant 0 : index
    %60 = vector.load %arg4[%c5_34, %c0_35, %c0_36] : memref<9x4x4xbf16, #tpu.memory_space<vmem>>, vector<1x4x4xbf16>
    %61 = vector.shape_cast %60 : vector<1x4x4xbf16> to vector<4x4xbf16>
    %62 = arith.truncf %59 : vector<4x256xf32> to vector<4x256xbf16>
    %cst_37 = arith.constant dense<0.000000e+00> : vector<4x256xf32>
    %63 = tpu.matmul %61, %62, %cst_37 {dimension_numbers = #tpu.dot_dimension_numbers<[1], [0], [0], [1], [0, 0, 1, 1], [], []>} : vector<4x4xbf16>, vector<4x256xbf16>, vector<4x256xf32> -> vector<4x256xf32>
    %64 = arith.addf %55, %63 : vector<4x256xf32>
    %c241_i32 = arith.constant 241 : i32
    %65 = tpu.dynamic_rotate %10 by %c241_i32 dim 1 : vector<4x256xf32>, i32 -> vector<4x256xf32>
    %c6 = arith.constant 6 : index
    %c0_38 = arith.constant 0 : index
    %66 = vector.load %arg6[%c6, %c0_38] : memref<9x256xf32, #tpu.memory_space<vmem>>, vector<1x256xf32>
    %67 = vector.broadcast %66 : vector<1x256xf32> to vector<4x256xf32>
    %68 = arith.mulf %65, %67 : vector<4x256xf32>
    %c6_39 = arith.constant 6 : index
    %c0_40 = arith.constant 0 : index
    %c0_41 = arith.constant 0 : index
    %69 = vector.load %arg4[%c6_39, %c0_40, %c0_41] : memref<9x4x4xbf16, #tpu.memory_space<vmem>>, vector<1x4x4xbf16>
    %70 = vector.shape_cast %69 : vector<1x4x4xbf16> to vector<4x4xbf16>
    %71 = arith.truncf %68 : vector<4x256xf32> to vector<4x256xbf16>
    %cst_42 = arith.constant dense<0.000000e+00> : vector<4x256xf32>
    %72 = tpu.matmul %70, %71, %cst_42 {dimension_numbers = #tpu.dot_dimension_numbers<[1], [0], [0], [1], [0, 0, 1, 1], [], []>} : vector<4x4xbf16>, vector<4x256xbf16>, vector<4x256xf32> -> vector<4x256xf32>
    %73 = arith.addf %64, %72 : vector<4x256xf32>
    %c240_i32 = arith.constant 240 : i32
    %74 = tpu.dynamic_rotate %10 by %c240_i32 dim 1 : vector<4x256xf32>, i32 -> vector<4x256xf32>
    %c7 = arith.constant 7 : index
    %c0_43 = arith.constant 0 : index
    %75 = vector.load %arg6[%c7, %c0_43] : memref<9x256xf32, #tpu.memory_space<vmem>>, vector<1x256xf32>
    %76 = vector.broadcast %75 : vector<1x256xf32> to vector<4x256xf32>
    %77 = arith.mulf %74, %76 : vector<4x256xf32>
    %c7_44 = arith.constant 7 : index
    %c0_45 = arith.constant 0 : index
    %c0_46 = arith.constant 0 : index
    %78 = vector.load %arg4[%c7_44, %c0_45, %c0_46] : memref<9x4x4xbf16, #tpu.memory_space<vmem>>, vector<1x4x4xbf16>
    %79 = vector.shape_cast %78 : vector<1x4x4xbf16> to vector<4x4xbf16>
    %80 = arith.truncf %77 : vector<4x256xf32> to vector<4x256xbf16>
    %cst_47 = arith.constant dense<0.000000e+00> : vector<4x256xf32>
    %81 = tpu.matmul %79, %80, %cst_47 {dimension_numbers = #tpu.dot_dimension_numbers<[1], [0], [0], [1], [0, 0, 1, 1], [], []>} : vector<4x4xbf16>, vector<4x256xbf16>, vector<4x256xf32> -> vector<4x256xf32>
    %82 = arith.addf %73, %81 : vector<4x256xf32>
    %c239_i32 = arith.constant 239 : i32
    %83 = tpu.dynamic_rotate %10 by %c239_i32 dim 1 : vector<4x256xf32>, i32 -> vector<4x256xf32>
    %c8 = arith.constant 8 : index
    %c0_48 = arith.constant 0 : index
    %84 = vector.load %arg6[%c8, %c0_48] : memref<9x256xf32, #tpu.memory_space<vmem>>, vector<1x256xf32>
    %85 = vector.broadcast %84 : vector<1x256xf32> to vector<4x256xf32>
    %86 = arith.mulf %83, %85 : vector<4x256xf32>
    %c8_49 = arith.constant 8 : index
    %c0_50 = arith.constant 0 : index
    %c0_51 = arith.constant 0 : index
    %87 = vector.load %arg4[%c8_49, %c0_50, %c0_51] : memref<9x4x4xbf16, #tpu.memory_space<vmem>>, vector<1x4x4xbf16>
    %88 = vector.shape_cast %87 : vector<1x4x4xbf16> to vector<4x4xbf16>
    %89 = arith.truncf %86 : vector<4x256xf32> to vector<4x256xbf16>
    %cst_52 = arith.constant dense<0.000000e+00> : vector<4x256xf32>
    %90 = tpu.matmul %88, %89, %cst_52 {dimension_numbers = #tpu.dot_dimension_numbers<[1], [0], [0], [1], [0, 0, 1, 1], [], []>} : vector<4x4xbf16>, vector<4x256xbf16>, vector<4x256xf32> -> vector<4x256xf32>
    %91 = arith.addf %82, %90 : vector<4x256xf32>
    %c0_53 = arith.constant 0 : index
    %c0_54 = arith.constant 0 : index
    %92 = vector.load %arg5[%c0_53, %c0_54] : memref<4x1xf32, #tpu.memory_space<vmem>>, vector<4x1xf32>
    %93 = vector.broadcast %92 : vector<4x1xf32> to vector<4x256xf32>
    %94 = arith.addf %91, %93 : vector<4x256xf32>
    %95 = arith.truncf %94 : vector<4x256xf32> to vector<4x256xbf16>
    %c0_55 = arith.constant 0 : index
    %c0_56 = arith.constant 0 : index
    %c0_57 = arith.constant 0 : index
    %96 = vector.load %arg7[%c0_55, %c0_56, %c0_57] : memref<1x4x256xbf16, #tpu.memory_space<vmem>>, vector<1x4x256xbf16>
    %97 = vector.shape_cast %96 : vector<1x4x256xbf16> to vector<4x256xbf16>
    %98 = vector.shape_cast %95 : vector<4x256xbf16> to vector<1x4x256xbf16>
    tpu.vector_store %arg7[%c0_55, %c0_56, %c0_57], %98 {strides = array<i32>} : memref<1x4x256xbf16, #tpu.memory_space<vmem>>, vector<1x4x256xbf16>,
    %99 = arith.extf %95 : vector<4x256xbf16> to vector<4x256xf32>
    %cst_58 = arith.constant dense<0.000000e+00> : vector<4xf32>
    %100 = vector.multi_reduction <add>, %99, %cst_58 [1] : vector<4x256xf32> to vector<4xf32>
    %101 = vector.shape_cast %100 : vector<4xf32> to vector<4x1xf32>
    %cst_59 = arith.constant 3.906250e-03 : f32
    %102 = vector.broadcast %cst_59 : f32 to vector<4x1xf32>
    %103 = arith.mulf %101, %102 : vector<4x1xf32>
    %104 = vector.broadcast %103 : vector<4x1xf32> to vector<4x256xf32>
    %105 = arith.subf %99, %104 : vector<4x256xf32>
    %106 = arith.mulf %105, %105 : vector<4x256xf32>
    %cst_60 = arith.constant dense<0.000000e+00> : vector<4xf32>
    %107 = vector.multi_reduction <add>, %106, %cst_60 [1] : vector<4x256xf32> to vector<4xf32>
    %108 = vector.shape_cast %107 : vector<4xf32> to vector<4x1xf32>
    %c0_61 = arith.constant 0 : index
    %c0_62 = arith.constant 0 : index
    %c0_63 = arith.constant 0 : index
    %109 = vector.load %arg8[%c0_61, %c0_62, %c0_63] : memref<1x4x2xf32, #tpu.memory_space<vmem>>, vector<1x4x1xf32>
    %110 = vector.shape_cast %109 : vector<1x4x1xf32> to vector<4x1xf32>
    %111 = vector.shape_cast %101 : vector<4x1xf32> to vector<1x4x1xf32>
    tpu.vector_store %arg8[%c0_61, %c0_62, %c0_63], %111 {strides = array<i32>} : memref<1x4x2xf32, #tpu.memory_space<vmem>>, vector<1x4x1xf32>,
    %c0_64 = arith.constant 0 : index
    %c0_65 = arith.constant 0 : index
    %c1_66 = arith.constant 1 : index
    %112 = vector.load %arg8[%c0_64, %c0_65, %c1_66] : memref<1x4x2xf32, #tpu.memory_space<vmem>>, vector<1x4x1xf32>
    %113 = vector.shape_cast %112 : vector<1x4x1xf32> to vector<4x1xf32>
    %114 = vector.shape_cast %108 : vector<4x1xf32> to vector<1x4x1xf32>
    tpu.vector_store %arg8[%c0_64, %c0_65, %c1_66], %114 {strides = array<i32>} : memref<1x4x2xf32, #tpu.memory_space<vmem>>, vector<1x4x1xf32>,
    return
  }
  func.func @transform_0(%arg0: i32) -> (i32, i32, i32) {
    %c0_i32 = arith.constant 0 : i32
    %c0_i32_0 = arith.constant 0 : i32
    %c0_i32_1 = arith.constant 0 : i32
    return %arg0, %c0_i32, %c0_i32_0 : i32, i32, i32
  }
  func.func @transform_1(%arg0: i32) -> (i32, i32) {
    %c0_i32 = arith.constant 0 : i32
    %c0_i32_0 = arith.constant 0 : i32
    %c0_i32_1 = arith.constant 0 : i32
    return %c0_i32, %c0_i32_0 : i32, i32
  }
  func.func @transform_2(%arg0: i32) -> (i32, i32) {
    %c0_i32 = arith.constant 0 : i32
    %c0_i32_0 = arith.constant 0 : i32
    %c0_i32_1 = arith.constant 0 : i32
    return %c0_i32, %c0_i32_0 : i32, i32
  }
  func.func @transform_3(%arg0: i32) -> (i32, i32, i32) {
    %c0_i32 = arith.constant 0 : i32
    %c0_i32_0 = arith.constant 0 : i32
    %c0_i32_1 = arith.constant 0 : i32
    %c0_i32_2 = arith.constant 0 : i32
    return %c0_i32, %c0_i32_0, %c0_i32_1 : i32, i32, i32
  }
  func.func @transform_4(%arg0: i32) -> (i32, i32) {
    %c0_i32 = arith.constant 0 : i32
    %c0_i32_0 = arith.constant 0 : i32
    %c0_i32_1 = arith.constant 0 : i32
    return %c0_i32, %c0_i32_0 : i32, i32
  }
  func.func @transform_5(%arg0: i32) -> (i32, i32) {
    %c0_i32 = arith.constant 0 : i32
    %c0_i32_0 = arith.constant 0 : i32
    %c0_i32_1 = arith.constant 0 : i32
    return %c0_i32, %c0_i32_0 : i32, i32
  }
  func.func @transform_6(%arg0: i32) -> (i32, i32, i32) {
    %c0_i32 = arith.constant 0 : i32
    %c0_i32_0 = arith.constant 0 : i32
    %c0_i32_1 = arith.constant 0 : i32
    return %arg0, %c0_i32, %c0_i32_0 : i32, i32, i32
  }
  func.func @transform_7(%arg0: i32) -> (i32, i32, i32) {
    %c0_i32 = arith.constant 0 : i32
    %c0_i32_0 = arith.constant 0 : i32
    %c0_i32_1 = arith.constant 0 : i32
    return %arg0, %c0_i32, %c0_i32_0 : i32, i32, i32
  }
}

module attributes {stable_mosaic.version = 11 : i64} {
  func.func @_bn_add_relu_kernel(%arg0: i32, %arg1: memref<1x16x256xf32, #tpu.memory_space<vmem>>, %arg2: memref<16x1xf32, #tpu.memory_space<vmem>>, %arg3: memref<16x1xf32, #tpu.memory_space<vmem>>, %arg4: memref<1x16x256xf32, #tpu.memory_space<vmem>>, %arg5: memref<1x16x256xf32, #tpu.memory_space<vmem>>) attributes {dimension_semantics = [#tpu.dimension_semantics<parallel>], iteration_bounds = array<i64: 2>, scalar_prefetch = 0 : i64, scratch_operands = 0 : i64, tpu.core_type = #tpu.core_type<tc>, window_params = [{transform_indices = @transform_0, window_bounds = array<i64: 1, 16, 256>}, {pipeline_mode = #tpu.pipeline_mode<synchronous>, transform_indices = @transform_1, window_bounds = array<i64: 16, 1>}, {pipeline_mode = #tpu.pipeline_mode<synchronous>, transform_indices = @transform_2, window_bounds = array<i64: 16, 1>}, {transform_indices = @transform_3, window_bounds = array<i64: 1, 16, 256>}, {transform_indices = @transform_4, window_bounds = array<i64: 1, 16, 256>}]} {
    %c0 = arith.constant 0 : index
    %c0_0 = arith.constant 0 : index
    %c0_1 = arith.constant 0 : index
    %0 = vector.load %arg1[%c0, %c0_0, %c0_1] : memref<1x16x256xf32, #tpu.memory_space<vmem>>, vector<1x16x256xf32>
    %1 = vector.shape_cast %0 : vector<1x16x256xf32> to vector<16x256xf32>
    %c0_2 = arith.constant 0 : index
    %c0_3 = arith.constant 0 : index
    %2 = vector.load %arg2[%c0_2, %c0_3] : memref<16x1xf32, #tpu.memory_space<vmem>>, vector<16x1xf32>
    %3 = vector.broadcast %2 : vector<16x1xf32> to vector<16x256xf32>
    %4 = arith.mulf %1, %3 : vector<16x256xf32>
    %c0_4 = arith.constant 0 : index
    %c0_5 = arith.constant 0 : index
    %5 = vector.load %arg3[%c0_4, %c0_5] : memref<16x1xf32, #tpu.memory_space<vmem>>, vector<16x1xf32>
    %6 = vector.broadcast %5 : vector<16x1xf32> to vector<16x256xf32>
    %7 = arith.addf %4, %6 : vector<16x256xf32>
    %c0_6 = arith.constant 0 : index
    %c0_7 = arith.constant 0 : index
    %c0_8 = arith.constant 0 : index
    %8 = vector.load %arg4[%c0_6, %c0_7, %c0_8] : memref<1x16x256xf32, #tpu.memory_space<vmem>>, vector<1x16x256xf32>
    %9 = vector.shape_cast %8 : vector<1x16x256xf32> to vector<16x256xf32>
    %10 = arith.addf %7, %9 : vector<16x256xf32>
    %cst = arith.constant 0.000000e+00 : f32
    %11 = vector.broadcast %cst : f32 to vector<16x256xf32>
    %12 = arith.maximumf %10, %11 : vector<16x256xf32>
    %c0_9 = arith.constant 0 : index
    %c0_10 = arith.constant 0 : index
    %c0_11 = arith.constant 0 : index
    %13 = vector.load %arg5[%c0_9, %c0_10, %c0_11] : memref<1x16x256xf32, #tpu.memory_space<vmem>>, vector<1x16x256xf32>
    %14 = vector.shape_cast %13 : vector<1x16x256xf32> to vector<16x256xf32>
    %15 = vector.shape_cast %12 : vector<16x256xf32> to vector<1x16x256xf32>
    tpu.vector_store %arg5[%c0_9, %c0_10, %c0_11], %15 {strides = array<i32>} : memref<1x16x256xf32, #tpu.memory_space<vmem>>, vector<1x16x256xf32>,
    return
  }
  func.func @transform_0(%arg0: i32) -> (i32, i32, i32) {
    %c0_i32 = arith.constant 0 : i32
    %c0_i32_0 = arith.constant 0 : i32
    %c0_i32_1 = arith.constant 0 : i32
    return %arg0, %c0_i32, %c0_i32_0 : i32, i32, i32
  }
  func.func @transform_1(%arg0: i32) -> (i32, i32) {
    %c0_i32 = arith.constant 0 : i32
    %c0_i32_0 = arith.constant 0 : i32
    %c0_i32_1 = arith.constant 0 : i32
    return %c0_i32, %c0_i32_0 : i32, i32
  }
  func.func @transform_2(%arg0: i32) -> (i32, i32) {
    %c0_i32 = arith.constant 0 : i32
    %c0_i32_0 = arith.constant 0 : i32
    %c0_i32_1 = arith.constant 0 : i32
    return %c0_i32, %c0_i32_0 : i32, i32
  }
  func.func @transform_3(%arg0: i32) -> (i32, i32, i32) {
    %c0_i32 = arith.constant 0 : i32
    %c0_i32_0 = arith.constant 0 : i32
    %c0_i32_1 = arith.constant 0 : i32
    return %arg0, %c0_i32, %c0_i32_0 : i32, i32, i32
  }
  func.func @transform_4(%arg0: i32) -> (i32, i32, i32) {
    %c0_i32 = arith.constant 0 : i32
    %c0_i32_0 = arith.constant 0 : i32
    %c0_i32_1 = arith.constant 0 : i32
    return %arg0, %c0_i32, %c0_i32_0 : i32, i32, i32
  }
}

</mosaic_0001>

<llo_original>
// kernel: block_forward.6
$region0: #{block_forward.6}
  #allocation0 [shape = 'u32[]', space=smem, size = 0x4, offset = 0x4, fixed_abs, tag = 'smem constant byte address 0x4 - core index']
  #allocation1 [shape = 'u32[144,128]{1,0:T(1,128)}', space=vmem, size = 0x12000, scoped, tag = 'internal scratch']
  %s0 = inlined_call_operand.vmem [shape: bf16[2,4,256], index: 0, kind: input, shape index: {}]
  %s1 = inlined_call_operand.vmem [shape: f32[4,1], index: 1, kind: input, shape index: {}]
  %s2 = inlined_call_operand.vmem [shape: f32[4,1], index: 2, kind: input, shape index: {}]
  %s3 = inlined_call_operand.vmem [shape: bf16[16,4], index: 3, kind: input, shape index: {}]
  %s4 = inlined_call_operand.vmem [shape: f32[16,1], index: 4, kind: input, shape index: {}]
  %s5 = inlined_call_operand.vmem [shape: f32[2,16,256], index: 5, kind: output, shape index: {0}]
  %s6 = inlined_call_operand.vmem [shape: f32[2,16,2], index: 6, kind: output, shape index: {1}]
  %7 = xla_tuple %s5, %s6
  %s8 = sld [smem:[#allocation0]]
  $region61: #{block_forward.6} parent=0
    _
  %s10 = ssub.s32 1, %s8
  %s11 = scalar_select 0, %s10, %s8
  loop: start=0, step=1, limit=4
  $region2: #{block_forward.6} parent=0 // loop_pre_header
    _
  $region3: #{block_forward.6} parent=0 // loop_header
    %s13 = sphi 0, %s17
    %p14 = scmp.ge.s32.totalorder %s13, 4
    %s23 = sphi 0, %s25
    %s26 = sphi 0, %s23
    %s27 = sphi 0, %s26
    %s43 = sphi 0, %s27
    %s47 = sphi 0, %s47
    %s49 = sphi 0, %s47
    %s50 = sphi 0, %s49
    %s64 = sphi 0, %s50
    %s68 = sphi 0, %s68
    %s70 = sphi 0, %s68
    %s71 = sphi 0, %s70
    %s85 = sphi 0, %s71
    %s89 = sphi 0, %s89
    %s91 = sphi 0, %s89
    %s92 = sphi 0, %s91
    %s106 = sphi 0, %s92
    %s110 = sphi 0, %s110
    %s112 = sphi 0, %s110
    %s113 = sphi 0, %s112
    %s127 = sphi 0, %s113
    %s133 = sphi 0, %s135
    %s136 = sphi 0, %s133
    %s137 = sphi 0, %s136
    %s153 = sphi 0, %s137
    %s159 = sphi 0, %s161
    %s162 = sphi 0, %s159
    %s163 = sphi 0, %s162
    %s179 = sphi 0, %s163
  $region4: #{block_forward.6} parent=0 // loop_header_branch
    %16 = sbr.rel (%p14) target = $region8
  $region5: #{block_forward.6} parent=0 // loop_body
    %s18 = ssub.s32 %s13, 1
    %s19 = ssub.s32 %s13, 2
    %s20 = sadd.s32 %s13, 1
    %s21 = ssub.s32 %s13, %s20
    %p22 = scmp.eq.s32.totalorder %s21, 0
    %s24 = sadd.s32 %s23, 1
    %s25 = scalar_select %p22, %s23, %s24
    %p28 = pneg %p22
    %p29 = scmp.eq.s32.totalorder %s13, 1
    %p30 = por %p28, %p29
    %p31 = scmp.ne.s32.totalorder %s23, %s26
    %p32 = scmp.eq.s32.totalorder %s13, 0
    %p33 = por %p31, %p32
    %p34 = scmp.ne.s32.totalorder %s23, %s26
    %p35 = scmp.eq.s32.totalorder %s18, 1
    %p36 = por %p34, %p35
    %p37 = scmp.ne.s32.totalorder %s26, %s27
    %p38 = scmp.eq.s32.totalorder %s18, 0
    %p39 = por %p37, %p38
    %p40 = scmp.ne.s32.totalorder %s26, %s27
    %p41 = scmp.eq.s32.totalorder %s19, 1
    %p42 = por %p40, %p41
    %p44 = scmp.ne.s32.totalorder %s27, %s43
    %p45 = scmp.eq.s32.totalorder %s19, 0
    %p46 = por %p44, %p45
    %s48 = sadd.s32 %s47, 1
    %p51 = scmp.eq.s32.totalorder %s13, 1
    %p52 = scmp.ne.s32.totalorder %s47, %s49
    %p53 = scmp.eq.s32.totalorder %s13, 0
    %p54 = por %p52, %p53
    %p55 = scmp.ne.s32.totalorder %s47, %s49
    %p56 = scmp.eq.s32.totalorder %s18, 1
    %p57 = por %p55, %p56
    %p58 = scmp.ne.s32.totalorder %s49, %s50
    %p59 = scmp.eq.s32.totalorder %s18, 0
    %p60 = por %p58, %p59
    %p61 = scmp.ne.s32.totalorder %s49, %s50
    %p62 = scmp.eq.s32.totalorder %s19, 1
    %p63 = por %p61, %p62
    %p65 = scmp.ne.s32.totalorder %s50, %s64
    %p66 = scmp.eq.s32.totalorder %s19, 0
    %p67 = por %p65, %p66
    %s69 = sadd.s32 %s68, 1
    %p72 = scmp.eq.s32.totalorder %s13, 1
    %p73 = scmp.ne.s32.totalorder %s68, %s70
    %p74 = scmp.eq.s32.totalorder %s13, 0
    %p75 = por %p73, %p74
    %p76 = scmp.ne.s32.totalorder %s68, %s70
    %p77 = scmp.eq.s32.totalorder %s18, 1
    %p78 = por %p76, %p77
    %p79 = scmp.ne.s32.totalorder %s70, %s71
    %p80 = scmp.eq.s32.totalorder %s18, 0
    %p81 = por %p79, %p80
    %p82 = scmp.ne.s32.totalorder %s70, %s71
    %p83 = scmp.eq.s32.totalorder %s19, 1
    %p84 = por %p82, %p83
    %p86 = scmp.ne.s32.totalorder %s71, %s85
    %p87 = scmp.eq.s32.totalorder %s19, 0
    %p88 = por %p86, %p87
    %s90 = sadd.s32 %s89, 1
    %p93 = scmp.eq.s32.totalorder %s13, 1
    %p94 = scmp.ne.s32.totalorder %s89, %s91
    %p95 = scmp.eq.s32.totalorder %s13, 0
    %p96 = por %p94, %p95
    %p97 = scmp.ne.s32.totalorder %s89, %s91
    %p98 = scmp.eq.s32.totalorder %s18, 1
    %p99 = por %p97, %p98
    %p100 = scmp.ne.s32.totalorder %s91, %s92
    %p101 = scmp.eq.s32.totalorder %s18, 0
    %p102 = por %p100, %p101
    %p103 = scmp.ne.s32.totalorder %s91, %s92
    %p104 = scmp.eq.s32.totalorder %s19, 1
    %p105 = por %p103, %p104
    %p107 = scmp.ne.s32.totalorder %s92, %s106
    %p108 = scmp.eq.s32.totalorder %s19, 0
    %p109 = por %p107, %p108
    %s111 = sadd.s32 %s110, 1
    %p114 = scmp.eq.s32.totalorder %s13, 1
    %p115 = scmp.ne.s32.totalorder %s110, %s112
    %p116 = scmp.eq.s32.totalorder %s13, 0
    %p117 = por %p115, %p116
    %p118 = scmp.ne.s32.totalorder %s110, %s112
    %p119 = scmp.eq.s32.totalorder %s18, 1
    %p120 = por %p118, %p119
    %p121 = scmp.ne.s32.totalorder %s112, %s113
    %p122 = scmp.eq.s32.totalorder %s18, 0
    %p123 = por %p121, %p122
    %p124 = scmp.ne.s32.totalorder %s112, %s113
    %p125 = scmp.eq.s32.totalorder %s19, 1
    %p126 = por %p124, %p125
    %p128 = scmp.ne.s32.totalorder %s113, %s127
    %p129 = scmp.eq.s32.totalorder %s19, 0
    %p130 = por %p128, %p129
    %s131 = ssub.s32 %s13, %s20
    %p132 = scmp.eq.s32.totalorder %s131, 0
    %s134 = sadd.s32 %s133, 1
    %s135 = scalar_select %p132, %s133, %s134
    %p138 = pneg %p132
    %p139 = scmp.eq.s32.totalorder %s13, 1
    %p140 = por %p138, %p139
    %p141 = scmp.ne.s32.totalorder %s133, %s136
    %p142 = scmp.eq.s32.totalorder %s13, 0
    %p143 = por %p141, %p142
    %p144 = scmp.ne.s32.totalorder %s133, %s136
    %p145 = scmp.eq.s32.totalorder %s18, 1
    %p146 = por %p144, %p145
    %p147 = scmp.ne.s32.totalorder %s136, %s137
    %p148 = scmp.eq.s32.totalorder %s18, 0
    %p149 = por %p147, %p148
    %p150 = scmp.ne.s32.totalorder %s136, %s137
    %p151 = scmp.eq.s32.totalorder %s19, 1
    %p152 = por %p150, %p151
    %p154 = scmp.ne.s32.totalorder %s137, %s153
    %p155 = scmp.eq.s32.totalorder %s19, 0
    %p156 = por %p154, %p155
    %s157 = ssub.s32 %s13, %s20
    %p158 = scmp.eq.s32.totalorder %s157, 0
    %s160 = sadd.s32 %s159, 1
    %s161 = scalar_select %p158, %s159, %s160
    %p164 = pneg %p158
    %p165 = scmp.eq.s32.totalorder %s13, 1
    %p166 = por %p164, %p165
    %p167 = scmp.ne.s32.totalorder %s159, %s162
    %p168 = scmp.eq.s32.totalorder %s13, 0
    %p169 = por %p167, %p168
    %p170 = scmp.ne.s32.totalorder %s159, %s162
    %p171 = scmp.eq.s32.totalorder %s18, 1
    %p172 = por %p170, %p171
    %p173 = scmp.ne.s32.totalorder %s162, %s163
    %p174 = scmp.eq.s32.totalorder %s18, 0
    %p175 = por %p173, %p174
    %p176 = scmp.ne.s32.totalorder %s162, %s163
    %p177 = scmp.eq.s32.totalorder %s19, 1
    %p178 = por %p176, %p177
    %p180 = scmp.ne.s32.totalorder %s163, %s179
    %p181 = scmp.eq.s32.totalorder %s19, 0
    %p182 = por %p180, %p181
    %p183 = scmp.le.s32.totalorder 1, %s13
    %p184 = scmp.lt.s32.totalorder %s13, 3
    %p185 = pnand %p183, %p184
    %p186 = pneg %p185
    // Predicated region
    $region9: #{block_forward.6} parent=5 // pred_check
      _
    $region10: #{block_forward.6} parent=5 // pred_check_branch
      %188 = sbr.rel (%p185) target = $region12
    $region11: #{block_forward.6} parent=5 // pred_region
      %s189 = ssub.s32 %s13, 1
      // Predicated region
      $region13: #{block_forward.6} parent=11 // pred_check
        %p190 = pneg %p60
      $region14: #{block_forward.6} parent=11 // pred_check_branch
        %192 = sbr.rel (%p190) target = $region16
      $region15: #{block_forward.6} parent=11 // pred_region
        _
      $region16: #{block_forward.6} parent=11 // pred_fallthru
        _
      // Predicated region
      $region17: #{block_forward.6} parent=11 // pred_check
        %p193 = pneg %p81
      $region18: #{block_forward.6} parent=11 // pred_check_branch
        %195 = sbr.rel (%p193) target = $region20
      $region19: #{block_forward.6} parent=11 // pred_region
        _
      $region20: #{block_forward.6} parent=11 // pred_fallthru
        _
      // Predicated region
      $region21: #{block_forward.6} parent=11 // pred_check
        %p196 = pneg %p102
      $region22: #{block_forward.6} parent=11 // pred_check_branch
        %198 = sbr.rel (%p196) target = $region24
      $region23: #{block_forward.6} parent=11 // pred_region
        _
      $region24: #{block_forward.6} parent=11 // pred_fallthru
        _
      // Predicated region
      $region25: #{block_forward.6} parent=11 // pred_check
        %p199 = pneg %p123
      $region26: #{block_forward.6} parent=11 // pred_check_branch
        %201 = sbr.rel (%p199) target = $region28
      $region27: #{block_forward.6} parent=11 // pred_region
        _
      $region28: #{block_forward.6} parent=11 // pred_fallthru
        _
    $region12: #{block_forward.6} parent=5 // pred_fallthru
      _
    %p202 = scmp.lt.s32.totalorder %s13, 2
    // Predicated region
    $region29: #{block_forward.6} parent=5 // pred_check
      %p203 = pneg %p202
    $region30: #{block_forward.6} parent=5 // pred_check_branch
      %205 = sbr.rel (%p203) target = $region32
    $region31: #{block_forward.6} parent=5 // pred_region
      // Predicated region
      $region33: #{block_forward.6} parent=31 // pred_check
        %p206 = pneg %p33
      $region34: #{block_forward.6} parent=31 // pred_check_branch
        %208 = sbr.rel (%p206) target = $region36
      $region35: #{block_forward.6} parent=31 // pred_region
        %p209 = scmp.lt.s32.totalorder %s13, 1
        %s210 = scalar_select %p209, %s13, 1
        %s211 = smul.addr %s210, 2
        %s212 = smul.addr %s211, 2
        %s213 = scalar_lea.vmem %s0, %s212
      $region36: #{block_forward.6} parent=31 // pred_fallthru
        _
    $region32: #{block_forward.6} parent=5 // pred_fallthru
      _
    %p214 = scmp.le.s32.totalorder 1, %s13
    %p215 = scmp.lt.s32.totalorder %s13, 3
    %p216 = pnand %p214, %p215
    %p217 = pneg %p216
    // Predicated region
    $region37: #{block_forward.6} parent=5 // pred_check
      _
    $region38: #{block_forward.6} parent=5 // pred_check_branch
      %219 = sbr.rel (%p216) target = $region40
    $region39: #{block_forward.6} parent=5 // pred_region
      %s220 = ssub.s32 %s13, 1
      %p221 = scmp.lt.s32.totalorder %s18, 1
      %s222 = scalar_select %p221, %s18, 1
      %s223 = smul.addr %s222, 2
      %s224 = smul.addr %s223, 2
      %s225 = scalar_lea.vmem %s0, %s224
      %p226 = pneg %p39
      %p227 = pneg %p36
      %p228 = pneg %p60
      %p229 = pneg %p57
      %p230 = pneg %p81
      %p231 = pneg %p78
      %p232 = pneg %p102
      %p233 = pneg %p99
      %p234 = pneg %p123
      %p235 = pneg %p120
      %p236 = pneg %p149
      %p237 = pneg %p146
      %p238 = scmp.lt.s32.totalorder %s18, 1
      %s239 = scalar_select %p238, %s18, 1
      %s240 = smul.addr %s239, 4
      %s241 = smul.addr %s240, 8
      %s242 = scalar_lea.vmem %s5, %s241
      %p243 = pneg %p175
      %p244 = pneg %p172
      %p245 = scmp.lt.s32.totalorder %s18, 1
      %s246 = scalar_select %p245, %s18, 1
      %s247 = smul.addr %s246, 2
      %s248 = smul.addr %s247, 8
      %s249 = scalar_lea.vmem %s6, %s248
      %p250 = scmp.lt.s32.totalorder %s18, 1
      %s251 = scalar_select %p250, %s18, 1
      %s252 = smul.addr %s251, 2
      %s253 = smul.addr %s252, 2
      %s254 = scalar_lea.vmem %s0, %s253
      %p255 = scmp.lt.s32.totalorder %s18, 1
      %s256 = scalar_select %p255, %s18, 1
      %s257 = smul.addr %s256, 4
      %s258 = smul.addr %s257, 8
      %s259 = scalar_lea.vmem %s5, %s258
      %p260 = scmp.lt.s32.totalorder %s18, 1
      %s261 = scalar_select %p260, %s18, 1
      %s262 = smul.addr %s261, 2
      %s263 = smul.addr %s262, 8
      %s264 = scalar_lea.vmem %s6, %s263
      %v266 = vld [vmem:[%s254] sm:$0xf]
      %v267 = vunpack.c.l.bf16 %v266
      %v268 = vld [vmem:[%s1] sm:$0xf]
      %270 = vset.pattern.permute.xlu0 0
      %271 = vperm.xlu0 %270, %v268
      %v272 = vpop.permute.xlu0 %271
      %v274 = vunpack.c.l.s4 839922192
      %v275 = vunpack.c.0.s8 %v274
      %v276 = vlaneseq
      %v277 = vshrl.u32 %v276, 7
      %v278 = vsub.s32 %v275, %v277
      %v279 = vrot.slane %v272, %v278
      %v281 = vmul.f32 %v267, %v279
      %v282 = vld [vmem:[%s2] sm:$0xf]
      %284 = vset.pattern.permute.xlu0 0
      %285 = vperm.xlu0 %284, %v282
      %v286 = vpop.permute.xlu0 %285
      %v288 = vunpack.c.l.s4 839922192
      %v289 = vunpack.c.0.s8 %v288
      %v290 = vlaneseq
      %v291 = vshrl.u32 %v290, 7
      %v292 = vsub.s32 %v289, %v291
      %v293 = vrot.slane %v286, %v292
      %v295 = vadd.f32 %v281, %v293
      %v296 = vmax.f32 %v295, 0.0
      %v297 = vld [vmem:[%s3] sm:$0xf]
      %v298 = vld [vmem:[%s3 + $0x4] sm:$0xf]
      %v300 = vcombine.high %v296, %v296
      %v302 = vpack.c.bf16 %v296, %v296
      %v303 = vpack.c.bf16 %v300, %v300
      %v304 = vld [vmem:[%s4] sm:$0xff]
      %v305 = vld [vmem:[%s4 + $0x8] sm:$0xff]
      %307 = vset.pattern.permute.xlu0 0
      %308 = vperm.xlu0 %307, %v304
      %v309 = vpop.permute.xlu0 %308
      %312 = vset.pattern.permute.xlu0 0
      %313 = vperm.xlu0 %312, %v305
      %v314 = vpop.permute.xlu0 %313
      %v318 = vunpack.c.l.b16 %v297
      %v319 = vunpack.c.l.b16 %v298
      %v320 = vpack.c.b16 %v319, %v318
      %vm321 = vcmask 31744
      %v323 = vsel %vm321, %v320, 0
      %vm325 = vcmask 1041408
      %v327 = vsel %vm325, %v302, 0
      %v330 = vsel %vm325, %v303, 0
      %332 = vmatprep.subr.bf16.mxu0 0
      %333 = vmatpush1.bf16.msra.mxu0 0
      %334 = vmatprep.subr.bf16.mxu0 0
      %335 = vmatpush1.bf16.msra.mxu0 0
      %336 = vmatprep.subr.bf16.mxu0 0
      %337 = vmatpush1.bf16.msra.mxu0 0
      %338 = vmatprep.subr.bf16.mxu0 0
      %339 = vmatpush1.bf16.msra.mxu0 0
      %340 = vmatprep.subr.bf16.mxu0 0
      %341 = vmatpush1.bf16.msra.mxu0 0
      %342 = vmatprep.subr.bf16.mxu0 0
      %343 = vmatpush1.bf16.msra.mxu0 0
      %344 = vmatprep.subr.bf16.mxu0 0
      %345 = vmatpush1.bf16.msra.mxu0 0
      %346 = vmatprep.subr.bf16.mxu0 %v330
      %347 = vmatpush1.bf16.msra.mxu0 %v327
      %348 = vmatprep.subr.bf16.mxu0 0
      %349 = vmatpush2.bf16.msra.mxu0 0
      %350 = vmatprep.subr.bf16.mxu0 0
      %351 = vmatpush2.bf16.msra.mxu0 0
      %352 = vmatprep.subr.bf16.mxu0 0
      %353 = vmatpush2.bf16.msra.mxu0 0
      %354 = vmatprep.subr.bf16.mxu0 0
      %355 = vmatpush2.bf16.msra.mxu0 0
      %356 = vmatprep.subr.bf16.mxu0 0
      %357 = vmatpush2.bf16.msra.mxu0 0
      %358 = vmatprep.subr.bf16.mxu0 0
      %359 = vmatpush2.bf16.msra.mxu0 0
      %360 = vmatprep.subr.bf16.mxu0 0
      %361 = vmatpush2.bf16.msra.mxu0 0
      %362 = vmatprep.subr.bf16.mxu0 0
      %363 = vmatpush2.bf16.msra.mxu0 0
      %364 = vmatprep.mubr.bf16.mxu0 0
      %365 = vmatmul.mubr.bf16.gmra.mxu0 %v323
      %v366 = vpop.f32.mrf.mxu0
      %v367 = vadd.f32 %v309, %v366
      %v368 = vpop.f32.mrf.mxu0
      %v369 = vadd.f32 %v309, %v368
      %v370 = vpop.f32.mrf.mxu0
      %v371 = vadd.f32 %v314, %v370
      %v372 = vpop.f32.mrf.mxu0
      %v373 = vadd.f32 %v314, %v372
      %374 = vdwg.mxu0
      %375 = vst [vmem:[%s259] sm:$0xff] %v367
      %376 = vst [vmem:[%s259 + $0x8] sm:$0xff] %v369
      %377 = vst [vmem:[%s259 + $0x10] sm:$0xff] %v371
      %378 = vst [vmem:[%s259 + $0x18] sm:$0xff] %v373
      %v379 = vadd.f32 %v367, %v369
      %380 = vadd.xlane.f32.xlu0 %v379
      %v381 = vpop.xlane.xlu0 %380
      %v382 = vadd.f32 %v371, %v373
      %383 = vadd.xlane.f32.xlu0 %v382
      %v384 = vpop.xlane.xlu0 %383
      %v385 = vmul.f32 %v381, 0.00390625
      %v386 = vmul.f32 %v384, 0.00390625
      %v387 = vsub.f32 %v367, %v385
      %v388 = vsub.f32 %v369, %v385
      %v389 = vsub.f32 %v371, %v386
      %v390 = vsub.f32 %v373, %v386
      %v391 = vmul.f32 %v387, %v387
      %v392 = vmul.f32 %v388, %v388
      %v393 = vmul.f32 %v389, %v389
      %v394 = vmul.f32 %v390, %v390
      %v395 = vadd.f32 %v391, %v392
      %396 = vadd.xlane.f32.xlu0 %v395
      %v397 = vpop.xlane.xlu0 %396
      %v398 = vadd.f32 %v393, %v394
      %399 = vadd.xlane.f32.xlu0 %v398
      %v400 = vpop.xlane.xlu0 %399
      %vm401 = vcmask 7168
      %402 = vst.msk [vmem:[%s264] sm:$0xff] %vm401, %v381
      %403 = vst.msk [vmem:[%s264 + $0x8] sm:$0xff] %vm401, %v384
      %vm404 = vcmask 15368
      %405 = vst.msk [vmem:[%s264] sm:$0xff] %vm404, %v397
      %406 = vst.msk [vmem:[%s264 + $0x8] sm:$0xff] %vm404, %v400
      %p407 = scmp.lt.s32.totalorder %s18, 1
      %s408 = scalar_select %p407, %s18, 1
      %s409 = smul.addr %s408, 4
      %s410 = smul.addr %s409, 8
      %s411 = scalar_lea.vmem %s5, %s410
      %p412 = scmp.lt.s32.totalorder %s18, 1
      %s413 = scalar_select %p412, %s18, 1
      %s414 = smul.addr %s413, 2
      %s415 = smul.addr %s414, 8
      %s416 = scalar_lea.vmem %s6, %s415
      // Predicated region
      $region41: #{block_forward.6} parent=39 // pred_check
        %p417 = pneg %p146
      $region42: #{block_forward.6} parent=39 // pred_check_branch
        %419 = sbr.rel (%p417) target = $region44
      $region43: #{block_forward.6} parent=39 // pred_region
        _
      $region44: #{block_forward.6} parent=39 // pred_fallthru
        _
      // Predicated region
      $region45: #{block_forward.6} parent=39 // pred_check
        %p420 = pneg %p172
      $region46: #{block_forward.6} parent=39 // pred_check_branch
        %422 = sbr.rel (%p420) target = $region48
      $region47: #{block_forward.6} parent=39 // pred_region
        _
      $region48: #{block_forward.6} parent=39 // pred_fallthru
        _
    $region40: #{block_forward.6} parent=5 // pred_fallthru
      _
    %p423 = scmp.le.s32.totalorder 2, %s13
    // Predicated region
    $region49: #{block_forward.6} parent=5 // pred_check
      %p424 = pneg %p423
    $region50: #{block_forward.6} parent=5 // pred_check_branch
      %426 = sbr.rel (%p424) target = $region52
    $region51: #{block_forward.6} parent=5 // pred_region
      %s427 = ssub.s32 %s13, 2
      // Predicated region
      $region53: #{block_forward.6} parent=51 // pred_check
        %p428 = pneg %p152
      $region54: #{block_forward.6} parent=51 // pred_check_branch
        %430 = sbr.rel (%p428) target = $region56
      $region55: #{block_forward.6} parent=51 // pred_region
        %p431 = scmp.lt.s32.totalorder %s19, 1
        %s432 = scalar_select %p431, %s19, 1
        %s433 = smul.addr %s432, 4
        %s434 = smul.addr %s433, 8
        %s435 = scalar_lea.vmem %s5, %s434
      $region56: #{block_forward.6} parent=51 // pred_fallthru
        _
      // Predicated region
      $region57: #{block_forward.6} parent=51 // pred_check
        %p436 = pneg %p178
      $region58: #{block_forward.6} parent=51 // pred_check_branch
        %438 = sbr.rel (%p436) target = $region60
      $region59: #{block_forward.6} parent=51 // pred_region
        %p439 = scmp.lt.s32.totalorder %s19, 1
        %s440 = scalar_select %p439, %s19, 1
        %s441 = smul.addr %s440, 2
        %s442 = smul.addr %s441, 8
        %s443 = scalar_lea.vmem %s6, %s442
      $region60: #{block_forward.6} parent=51 // pred_fallthru
        _
    $region52: #{block_forward.6} parent=5 // pred_fallthru
      _
  $region6: #{block_forward.6} parent=0 // loop_footer
    %s17 = sadd.s32 1, %s13
  $region7: #{block_forward.6} parent=0 // loop_footer_branch
    %12 = sbr.rel target = $region3
  $region8: #{block_forward.6} parent=0 // loop_exit
    _

// kernel: block_forward.4
$region0: #{block_forward.4}
  #allocation0 [shape = 'u32[]', space=smem, size = 0x4, offset = 0x4, fixed_abs, tag = 'smem constant byte address 0x4 - core index']
  #allocation1 [shape = 'u32[144,128]{1,0:T(1,128)}', space=vmem, size = 0x12000, scoped, tag = 'internal scratch']
  %s0 = inlined_call_operand.vmem [shape: f32[2,16,256], index: 0, kind: input, shape index: {}]
  %s1 = inlined_call_operand.vmem [shape: bf16[4,16], index: 1, kind: input, shape index: {}]
  %s2 = inlined_call_operand.vmem [shape: f32[4,1], index: 2, kind: input, shape index: {}]
  %s3 = inlined_call_operand.vmem [shape: bf16[2,4,256], index: 3, kind: output, shape index: {0}]
  %s4 = inlined_call_operand.vmem [shape: f32[2,4,2], index: 4, kind: output, shape index: {1}]
  %5 = xla_tuple %s3, %s4
  %s6 = sld [smem:[#allocation0]]
  $region53: #{block_forward.4} parent=0
    _
  %s8 = ssub.s32 1, %s6
  %s9 = scalar_select 0, %s8, %s6
  loop: start=0, step=1, limit=4
  $region2: #{block_forward.4} parent=0 // loop_pre_header
    _
  $region3: #{block_forward.4} parent=0 // loop_header
    %s11 = sphi 0, %s15
    %p12 = scmp.ge.s32.totalorder %s11, 4
    %s21 = sphi 0, %s23
    %s24 = sphi 0, %s21
    %s25 = sphi 0, %s24
    %s41 = sphi 0, %s25
    %s45 = sphi 0, %s45
    %s47 = sphi 0, %s45
    %s48 = sphi 0, %s47
    %s62 = sphi 0, %s48
    %s66 = sphi 0, %s66
    %s68 = sphi 0, %s66
    %s69 = sphi 0, %s68
    %s83 = sphi 0, %s69
    %s89 = sphi 0, %s91
    %s92 = sphi 0, %s89
    %s93 = sphi 0, %s92
    %s109 = sphi 0, %s93
    %s115 = sphi 0, %s117
    %s118 = sphi 0, %s115
    %s119 = sphi 0, %s118
    %s135 = sphi 0, %s119
  $region4: #{block_forward.4} parent=0 // loop_header_branch
    %14 = sbr.rel (%p12) target = $region8
  $region5: #{block_forward.4} parent=0 // loop_body
    %s16 = ssub.s32 %s11, 1
    %s17 = ssub.s32 %s11, 2
    %s18 = sadd.s32 %s11, 1
    %s19 = ssub.s32 %s11, %s18
    %p20 = scmp.eq.s32.totalorder %s19, 0
    %s22 = sadd.s32 %s21, 1
    %s23 = scalar_select %p20, %s21, %s22
    %p26 = pneg %p20
    %p27 = scmp.eq.s32.totalorder %s11, 1
    %p28 = por %p26, %p27
    %p29 = scmp.ne.s32.totalorder %s21, %s24
    %p30 = scmp.eq.s32.totalorder %s11, 0
    %p31 = por %p29, %p30
    %p32 = scmp.ne.s32.totalorder %s21, %s24
    %p33 = scmp.eq.s32.totalorder %s16, 1
    %p34 = por %p32, %p33
    %p35 = scmp.ne.s32.totalorder %s24, %s25
    %p36 = scmp.eq.s32.totalorder %s16, 0
    %p37 = por %p35, %p36
    %p38 = scmp.ne.s32.totalorder %s24, %s25
    %p39 = scmp.eq.s32.totalorder %s17, 1
    %p40 = por %p38, %p39
    %p42 = scmp.ne.s32.totalorder %s25, %s41
    %p43 = scmp.eq.s32.totalorder %s17, 0
    %p44 = por %p42, %p43
    %s46 = sadd.s32 %s45, 1
    %p49 = scmp.eq.s32.totalorder %s11, 1
    %p50 = scmp.ne.s32.totalorder %s45, %s47
    %p51 = scmp.eq.s32.totalorder %s11, 0
    %p52 = por %p50, %p51
    %p53 = scmp.ne.s32.totalorder %s45, %s47
    %p54 = scmp.eq.s32.totalorder %s16, 1
    %p55 = por %p53, %p54
    %p56 = scmp.ne.s32.totalorder %s47, %s48
    %p57 = scmp.eq.s32.totalorder %s16, 0
    %p58 = por %p56, %p57
    %p59 = scmp.ne.s32.totalorder %s47, %s48
    %p60 = scmp.eq.s32.totalorder %s17, 1
    %p61 = por %p59, %p60
    %p63 = scmp.ne.s32.totalorder %s48, %s62
    %p64 = scmp.eq.s32.totalorder %s17, 0
    %p65 = por %p63, %p64
    %s67 = sadd.s32 %s66, 1
    %p70 = scmp.eq.s32.totalorder %s11, 1
    %p71 = scmp.ne.s32.totalorder %s66, %s68
    %p72 = scmp.eq.s32.totalorder %s11, 0
    %p73 = por %p71, %p72
    %p74 = scmp.ne.s32.totalorder %s66, %s68
    %p75 = scmp.eq.s32.totalorder %s16, 1
    %p76 = por %p74, %p75
    %p77 = scmp.ne.s32.totalorder %s68, %s69
    %p78 = scmp.eq.s32.totalorder %s16, 0
    %p79 = por %p77, %p78
    %p80 = scmp.ne.s32.totalorder %s68, %s69
    %p81 = scmp.eq.s32.totalorder %s17, 1
    %p82 = por %p80, %p81
    %p84 = scmp.ne.s32.totalorder %s69, %s83
    %p85 = scmp.eq.s32.totalorder %s17, 0
    %p86 = por %p84, %p85
    %s87 = ssub.s32 %s11, %s18
    %p88 = scmp.eq.s32.totalorder %s87, 0
    %s90 = sadd.s32 %s89, 1
    %s91 = scalar_select %p88, %s89, %s90
    %p94 = pneg %p88
    %p95 = scmp.eq.s32.totalorder %s11, 1
    %p96 = por %p94, %p95
    %p97 = scmp.ne.s32.totalorder %s89, %s92
    %p98 = scmp.eq.s32.totalorder %s11, 0
    %p99 = por %p97, %p98
    %p100 = scmp.ne.s32.totalorder %s89, %s92
    %p101 = scmp.eq.s32.totalorder %s16, 1
    %p102 = por %p100, %p101
    %p103 = scmp.ne.s32.totalorder %s92, %s93
    %p104 = scmp.eq.s32.totalorder %s16, 0
    %p105 = por %p103, %p104
    %p106 = scmp.ne.s32.totalorder %s92, %s93
    %p107 = scmp.eq.s32.totalorder %s17, 1
    %p108 = por %p106, %p107
    %p110 = scmp.ne.s32.totalorder %s93, %s109
    %p111 = scmp.eq.s32.totalorder %s17, 0
    %p112 = por %p110, %p111
    %s113 = ssub.s32 %s11, %s18
    %p114 = scmp.eq.s32.totalorder %s113, 0
    %s116 = sadd.s32 %s115, 1
    %s117 = scalar_select %p114, %s115, %s116
    %p120 = pneg %p114
    %p121 = scmp.eq.s32.totalorder %s11, 1
    %p122 = por %p120, %p121
    %p123 = scmp.ne.s32.totalorder %s115, %s118
    %p124 = scmp.eq.s32.totalorder %s11, 0
    %p125 = por %p123, %p124
    %p126 = scmp.ne.s32.totalorder %s115, %s118
    %p127 = scmp.eq.s32.totalorder %s16, 1
    %p128 = por %p126, %p127
    %p129 = scmp.ne.s32.totalorder %s118, %s119
    %p130 = scmp.eq.s32.totalorder %s16, 0
    %p131 = por %p129, %p130
    %p132 = scmp.ne.s32.totalorder %s118, %s119
    %p133 = scmp.eq.s32.totalorder %s17, 1
    %p134 = por %p132, %p133
    %p136 = scmp.ne.s32.totalorder %s119, %s135
    %p137 = scmp.eq.s32.totalorder %s17, 0
    %p138 = por %p136, %p137
    %p139 = scmp.le.s32.totalorder 1, %s11
    %p140 = scmp.lt.s32.totalorder %s11, 3
    %p141 = pnand %p139, %p140
    %p142 = pneg %p141
    // Predicated region
    $region9: #{block_forward.4} parent=5 // pred_check
      _
    $region10: #{block_forward.4} parent=5 // pred_check_branch
      %144 = sbr.rel (%p141) target = $region12
    $region11: #{block_forward.4} parent=5 // pred_region
      %s145 = ssub.s32 %s11, 1
      // Predicated region
      $region13: #{block_forward.4} parent=11 // pred_check
        %p146 = pneg %p58
      $region14: #{block_forward.4} parent=11 // pred_check_branch
        %148 = sbr.rel (%p146) target = $region16
      $region15: #{block_forward.4} parent=11 // pred_region
        _
      $region16: #{block_forward.4} parent=11 // pred_fallthru
        _
      // Predicated region
      $region17: #{block_forward.4} parent=11 // pred_check
        %p149 = pneg %p79
      $region18: #{block_forward.4} parent=11 // pred_check_branch
        %151 = sbr.rel (%p149) target = $region20
      $region19: #{block_forward.4} parent=11 // pred_region
        _
      $region20: #{block_forward.4} parent=11 // pred_fallthru
        _
    $region12: #{block_forward.4} parent=5 // pred_fallthru
      _
    %p152 = scmp.lt.s32.totalorder %s11, 2
    // Predicated region
    $region21: #{block_forward.4} parent=5 // pred_check
      %p153 = pneg %p152
    $region22: #{block_forward.4} parent=5 // pred_check_branch
      %155 = sbr.rel (%p153) target = $region24
    $region23: #{block_forward.4} parent=5 // pred_region
      // Predicated region
      $region25: #{block_forward.4} parent=23 // pred_check
        %p156 = pneg %p31
      $region26: #{block_forward.4} parent=23 // pred_check_branch
        %158 = sbr.rel (%p156) target = $region28
      $region27: #{block_forward.4} parent=23 // pred_region
        %p159 = scmp.lt.s32.totalorder %s11, 1
        %s160 = scalar_select %p159, %s11, 1
        %s161 = smul.addr %s160, 4
        %s162 = smul.addr %s161, 8
        %s163 = scalar_lea.vmem %s0, %s162
      $region28: #{block_forward.4} parent=23 // pred_fallthru
        _
    $region24: #{block_forward.4} parent=5 // pred_fallthru
      _
    %p164 = scmp.le.s32.totalorder 1, %s11
    %p165 = scmp.lt.s32.totalorder %s11, 3
    %p166 = pnand %p164, %p165
    %p167 = pneg %p166
    // Predicated region
    $region29: #{block_forward.4} parent=5 // pred_check
      _
    $region30: #{block_forward.4} parent=5 // pred_check_branch
      %169 = sbr.rel (%p166) target = $region32
    $region31: #{block_forward.4} parent=5 // pred_region
      %s170 = ssub.s32 %s11, 1
      %p171 = scmp.lt.s32.totalorder %s16, 1
      %s172 = scalar_select %p171, %s16, 1
      %s173 = smul.addr %s172, 4
      %s174 = smul.addr %s173, 8
      %s175 = scalar_lea.vmem %s0, %s174
      %p176 = pneg %p37
      %p177 = pneg %p34
      %p178 = pneg %p58
      %p179 = pneg %p55
      %p180 = pneg %p79
      %p181 = pneg %p76
      %p182 = pneg %p105
      %p183 = pneg %p102
      %p184 = scmp.lt.s32.totalorder %s16, 1
      %s185 = scalar_select %p184, %s16, 1
      %s186 = smul.addr %s185, 2
      %s187 = smul.addr %s186, 2
      %s188 = scalar_lea.vmem %s3, %s187
      %p189 = pneg %p131
      %p190 = pneg %p128
      %p191 = scmp.lt.s32.totalorder %s16, 1
      %s192 = scalar_select %p191, %s16, 1
      %s193 = smul.addr %s192, 4
      %s194 = scalar_lea.vmem %s4, %s193
      %p195 = scmp.lt.s32.totalorder %s16, 1
      %s196 = scalar_select %p195, %s16, 1
      %s197 = smul.addr %s196, 4
      %s198 = smul.addr %s197, 8
      %s199 = scalar_lea.vmem %s0, %s198
      %p200 = scmp.lt.s32.totalorder %s16, 1
      %s201 = scalar_select %p200, %s16, 1
      %s202 = smul.addr %s201, 2
      %s203 = smul.addr %s202, 2
      %s204 = scalar_lea.vmem %s3, %s203
      %p205 = scmp.lt.s32.totalorder %s16, 1
      %s206 = scalar_select %p205, %s16, 1
      %s207 = smul.addr %s206, 4
      %s208 = scalar_lea.vmem %s4, %s207
      %v210 = vld [vmem:[%s199] sm:$0xff]
      %v211 = vld [vmem:[%s199 + $0x8] sm:$0xff]
      %v212 = vld [vmem:[%s199 + $0x10] sm:$0xff]
      %v213 = vld [vmem:[%s199 + $0x18] sm:$0xff]
      %v214 = vld [vmem:[%s1] sm:$0x3]
      %v215 = vpack.c.bf16 %v212, %v210
      %v216 = vpack.c.bf16 %v213, %v211
      %v217 = vld [vmem:[%s2] sm:$0xf]
      %219 = vset.pattern.permute.xlu0 0
      %220 = vperm.xlu0 %219, %v217
      %v221 = vpop.permute.xlu0 %220
      %vm223 = vcmask 130048
      %v225 = vsel %vm223, %v214, 0
      %227 = vmatprep.subr.bf16.mxu0 0
      %228 = vmatpush1.bf16.msra.mxu0 0
      %229 = vmatprep.subr.bf16.mxu0 0
      %230 = vmatpush1.bf16.msra.mxu0 0
      %231 = vmatprep.subr.bf16.mxu0 0
      %232 = vmatpush1.bf16.msra.mxu0 0
      %233 = vmatprep.subr.bf16.mxu0 0
      %234 = vmatpush1.bf16.msra.mxu0 0
      %235 = vmatprep.subr.bf16.mxu0 0
      %236 = vmatpush1.bf16.msra.mxu0 0
      %237 = vmatprep.subr.bf16.mxu0 0
      %238 = vmatpush1.bf16.msra.mxu0 0
      %239 = vmatprep.subr.bf16.mxu0 0
      %240 = vmatpush1.bf16.msra.mxu0 0
      %241 = vmatprep.subr.bf16.mxu0 %v216
      %242 = vmatpush1.bf16.msra.mxu0 %v215
      %243 = vmatprep.subr.bf16.mxu0 0
      %244 = vmatpush2.bf16.msra.mxu0 0
      %245 = vmatprep.subr.bf16.mxu0 0
      %246 = vmatpush2.bf16.msra.mxu0 0
      %247 = vmatprep.subr.bf16.mxu0 0
      %248 = vmatpush2.bf16.msra.mxu0 0
      %249 = vmatprep.subr.bf16.mxu0 0
      %250 = vmatpush2.bf16.msra.mxu0 0
      %251 = vmatprep.subr.bf16.mxu0 0
      %252 = vmatpush2.bf16.msra.mxu0 0
      %253 = vmatprep.subr.bf16.mxu0 0
      %254 = vmatpush2.bf16.msra.mxu0 0
      %255 = vmatprep.subr.bf16.mxu0 0
      %256 = vmatpush2.bf16.msra.mxu0 0
      %257 = vmatprep.subr.bf16.mxu0 0
      %258 = vmatpush2.bf16.msra.mxu0 0
      %259 = vmatprep.mubr.bf16.mxu0 0
      %260 = vmatmul.mubr.bf16.gmra.mxu0 %v225
      %v261 = vpop.f32.mrf.mxu0
      %v262 = vadd.f32 %v221, %v261
      %v263 = vpop.f32.mrf.mxu0
      %v264 = vadd.f32 %v221, %v263
      %v265 = vpop.f32.mrf.mxu0
      %v266 = vpop.f32.mrf.mxu0
      %267 = vdwg.mxu0
      %v268 = vpack.c.bf16 %v262, %v262
      %v269 = vpack.c.bf16 %v264, %v264
      %v272 = vcombine.low %v268, %v269
      %v274 = vunpack.c.l.s4 1983009808
      %v275 = vunpack.c.0.s8 %v274
      %v276 = vlaneseq
      %v277 = vshrl.u32 %v276, 7
      %v278 = vsub.s32 %v275, %v277
      %v279 = vrot.slane %v272, %v278
      %281 = vst [vmem:[%s204] sm:$0xf] %v279
      %v282 = vunpack.c.l.bf16 %v268
      %v283 = vunpack.c.l.bf16 %v269
      %vm284 = vcmask 1043456
      %v285 = vsel %vm284, %v282, 0.0
      %v286 = vsel %vm284, %v283, 0.0
      %v287 = vadd.f32 %v285, %v286
      %288 = vadd.xlane.f32.xlu0 %v287
      %v289 = vpop.xlane.xlu0 %288
      %v290 = vmul.f32 %v289, 0.00390625
      %v291 = vsub.f32 %v282, %v290
      %v292 = vsub.f32 %v283, %v290
      %v293 = vmul.f32 %v291, %v291
      %v294 = vmul.f32 %v292, %v292
      %v295 = vsel %vm284, %v293, 0.0
      %v296 = vsel %vm284, %v294, 0.0
      %v297 = vadd.f32 %v295, %v296
      %298 = vadd.xlane.f32.xlu0 %v297
      %v299 = vpop.xlane.xlu0 %298
      %vm300 = vcmask 3072
      %301 = vst.msk [vmem:[%s208] sm:$0xf] %vm300, %v289
      %vm302 = vcmask 11272
      %303 = vst.msk [vmem:[%s208] sm:$0xf] %vm302, %v299
      %p304 = scmp.lt.s32.totalorder %s16, 1
      %s305 = scalar_select %p304, %s16, 1
      %s306 = smul.addr %s305, 2
      %s307 = smul.addr %s306, 2
      %s308 = scalar_lea.vmem %s3, %s307
      %p309 = scmp.lt.s32.totalorder %s16, 1
      %s310 = scalar_select %p309, %s16, 1
      %s311 = smul.addr %s310, 4
      %s312 = scalar_lea.vmem %s4, %s311
      // Predicated region
      $region33: #{block_forward.4} parent=31 // pred_check
        %p313 = pneg %p102
      $region34: #{block_forward.4} parent=31 // pred_check_branch
        %315 = sbr.rel (%p313) target = $region36
      $region35: #{block_forward.4} parent=31 // pred_region
        _
      $region36: #{block_forward.4} parent=31 // pred_fallthru
        _
      // Predicated region
      $region37: #{block_forward.4} parent=31 // pred_check
        %p316 = pneg %p128
      $region38: #{block_forward.4} parent=31 // pred_check_branch
        %318 = sbr.rel (%p316) target = $region40
      $region39: #{block_forward.4} parent=31 // pred_region
        _
      $region40: #{block_forward.4} parent=31 // pred_fallthru
        _
    $region32: #{block_forward.4} parent=5 // pred_fallthru
      _
    %p319 = scmp.le.s32.totalorder 2, %s11
    // Predicated region
    $region41: #{block_forward.4} parent=5 // pred_check
      %p320 = pneg %p319
    $region42: #{block_forward.4} parent=5 // pred_check_branch
      %322 = sbr.rel (%p320) target = $region44
    $region43: #{block_forward.4} parent=5 // pred_region
      %s323 = ssub.s32 %s11, 2
      // Predicated region
      $region45: #{block_forward.4} parent=43 // pred_check
        %p324 = pneg %p108
      $region46: #{block_forward.4} parent=43 // pred_check_branch
        %326 = sbr.rel (%p324) target = $region48
      $region47: #{block_forward.4} parent=43 // pred_region
        %p327 = scmp.lt.s32.totalorder %s17, 1
        %s328 = scalar_select %p327, %s17, 1
        %s329 = smul.addr %s328, 2
        %s330 = smul.addr %s329, 2
        %s331 = scalar_lea.vmem %s3, %s330
      $region48: #{block_forward.4} parent=43 // pred_fallthru
        _
      // Predicated region
      $region49: #{block_forward.4} parent=43 // pred_check
        %p332 = pneg %p134
      $region50: #{block_forward.4} parent=43 // pred_check_branch
        %334 = sbr.rel (%p332) target = $region52
      $region51: #{block_forward.4} parent=43 // pred_region
        %p335 = scmp.lt.s32.totalorder %s17, 1
        %s336 = scalar_select %p335, %s17, 1
        %s337 = smul.addr %s336, 4
        %s338 = scalar_lea.vmem %s4, %s337
      $region52: #{block_forward.4} parent=43 // pred_fallthru
        _
    $region44: #{block_forward.4} parent=5 // pred_fallthru
      _
  $region6: #{block_forward.4} parent=0 // loop_footer
    %s15 = sadd.s32 1, %s11
  $region7: #{block_forward.4} parent=0 // loop_footer_branch
    %10 = sbr.rel target = $region3
  $region8: #{block_forward.4} parent=0 // loop_exit
    _

// kernel: block_forward.5
$region0: #{block_forward.5}
  #allocation0 [shape = 'u32[]', space=smem, size = 0x4, offset = 0x4, fixed_abs, tag = 'smem constant byte address 0x4 - core index']
  #allocation1 [shape = 'u32[144,128]{1,0:T(1,128)}', space=vmem, size = 0x12000, scoped, tag = 'internal scratch']
  %s0 = inlined_call_operand.vmem [shape: bf16[2,4,256], index: 0, kind: input, shape index: {}]
  %s1 = inlined_call_operand.vmem [shape: f32[4,1], index: 1, kind: input, shape index: {}]
  %s2 = inlined_call_operand.vmem [shape: f32[4,1], index: 2, kind: input, shape index: {}]
  %s3 = inlined_call_operand.vmem [shape: bf16[9,4,4], index: 3, kind: input, shape index: {}]
  %s4 = inlined_call_operand.vmem [shape: f32[4,1], index: 4, kind: input, shape index: {}]
  %s5 = inlined_call_operand.vmem [shape: f32[9,256], index: 5, kind: input, shape index: {}]
  %s6 = inlined_call_operand.vmem [shape: bf16[2,4,256], index: 6, kind: output, shape index: {0}]
  %s7 = inlined_call_operand.vmem [shape: f32[2,4,2], index: 7, kind: output, shape index: {1}]
  %8 = xla_tuple %s6, %s7
  %s9 = sld [smem:[#allocation0]]
  $region65: #{block_forward.5} parent=0
    _
  %s11 = ssub.s32 1, %s9
  %s12 = scalar_select 0, %s11, %s9
  loop: start=0, step=1, limit=4
  $region2: #{block_forward.5} parent=0 // loop_pre_header
    _
  $region3: #{block_forward.5} parent=0 // loop_header
    %s14 = sphi 0, %s18
    %p15 = scmp.ge.s32.totalorder %s14, 4
    %s24 = sphi 0, %s26
    %s27 = sphi 0, %s24
    %s28 = sphi 0, %s27
    %s44 = sphi 0, %s28
    %s48 = sphi 0, %s48
    %s50 = sphi 0, %s48
    %s51 = sphi 0, %s50
    %s65 = sphi 0, %s51
    %s69 = sphi 0, %s69
    %s71 = sphi 0, %s69
    %s72 = sphi 0, %s71
    %s86 = sphi 0, %s72
    %s90 = sphi 0, %s90
    %s92 = sphi 0, %s90
    %s93 = sphi 0, %s92
    %s107 = sphi 0, %s93
    %s111 = sphi 0, %s111
    %s113 = sphi 0, %s111
    %s114 = sphi 0, %s113
    %s128 = sphi 0, %s114
    %s132 = sphi 0, %s132
    %s134 = sphi 0, %s132
    %s135 = sphi 0, %s134
    %s149 = sphi 0, %s135
    %s155 = sphi 0, %s157
    %s158 = sphi 0, %s155
    %s159 = sphi 0, %s158
    %s175 = sphi 0, %s159
    %s181 = sphi 0, %s183
    %s184 = sphi 0, %s181
    %s185 = sphi 0, %s184
    %s201 = sphi 0, %s185
  $region4: #{block_forward.5} parent=0 // loop_header_branch
    %17 = sbr.rel (%p15) target = $region8
  $region5: #{block_forward.5} parent=0 // loop_body
    %s19 = ssub.s32 %s14, 1
    %s20 = ssub.s32 %s14, 2
    %s21 = sadd.s32 %s14, 1
    %s22 = ssub.s32 %s14, %s21
    %p23 = scmp.eq.s32.totalorder %s22, 0
    %s25 = sadd.s32 %s24, 1
    %s26 = scalar_select %p23, %s24, %s25
    %p29 = pneg %p23
    %p30 = scmp.eq.s32.totalorder %s14, 1
    %p31 = por %p29, %p30
    %p32 = scmp.ne.s32.totalorder %s24, %s27
    %p33 = scmp.eq.s32.totalorder %s14, 0
    %p34 = por %p32, %p33
    %p35 = scmp.ne.s32.totalorder %s24, %s27
    %p36 = scmp.eq.s32.totalorder %s19, 1
    %p37 = por %p35, %p36
    %p38 = scmp.ne.s32.totalorder %s27, %s28
    %p39 = scmp.eq.s32.totalorder %s19, 0
    %p40 = por %p38, %p39
    %p41 = scmp.ne.s32.totalorder %s27, %s28
    %p42 = scmp.eq.s32.totalorder %s20, 1
    %p43 = por %p41, %p42
    %p45 = scmp.ne.s32.totalorder %s28, %s44
    %p46 = scmp.eq.s32.totalorder %s20, 0
    %p47 = por %p45, %p46
    %s49 = sadd.s32 %s48, 1
    %p52 = scmp.eq.s32.totalorder %s14, 1
    %p53 = scmp.ne.s32.totalorder %s48, %s50
    %p54 = scmp.eq.s32.totalorder %s14, 0
    %p55 = por %p53, %p54
    %p56 = scmp.ne.s32.totalorder %s48, %s50
    %p57 = scmp.eq.s32.totalorder %s19, 1
    %p58 = por %p56, %p57
    %p59 = scmp.ne.s32.totalorder %s50, %s51
    %p60 = scmp.eq.s32.totalorder %s19, 0
    %p61 = por %p59, %p60
    %p62 = scmp.ne.s32.totalorder %s50, %s51
    %p63 = scmp.eq.s32.totalorder %s20, 1
    %p64 = por %p62, %p63
    %p66 = scmp.ne.s32.totalorder %s51, %s65
    %p67 = scmp.eq.s32.totalorder %s20, 0
    %p68 = por %p66, %p67
    %s70 = sadd.s32 %s69, 1
    %p73 = scmp.eq.s32.totalorder %s14, 1
    %p74 = scmp.ne.s32.totalorder %s69, %s71
    %p75 = scmp.eq.s32.totalorder %s14, 0
    %p76 = por %p74, %p75
    %p77 = scmp.ne.s32.totalorder %s69, %s71
    %p78 = scmp.eq.s32.totalorder %s19, 1
    %p79 = por %p77, %p78
    %p80 = scmp.ne.s32.totalorder %s71, %s72
    %p81 = scmp.eq.s32.totalorder %s19, 0
    %p82 = por %p80, %p81
    %p83 = scmp.ne.s32.totalorder %s71, %s72
    %p84 = scmp.eq.s32.totalorder %s20, 1
    %p85 = por %p83, %p84
    %p87 = scmp.ne.s32.totalorder %s72, %s86
    %p88 = scmp.eq.s32.totalorder %s20, 0
    %p89 = por %p87, %p88
    %s91 = sadd.s32 %s90, 1
    %p94 = scmp.eq.s32.totalorder %s14, 1
    %p95 = scmp.ne.s32.totalorder %s90, %s92
    %p96 = scmp.eq.s32.totalorder %s14, 0
    %p97 = por %p95, %p96
    %p98 = scmp.ne.s32.totalorder %s90, %s92
    %p99 = scmp.eq.s32.totalorder %s19, 1
    %p100 = por %p98, %p99
    %p101 = scmp.ne.s32.totalorder %s92, %s93
    %p102 = scmp.eq.s32.totalorder %s19, 0
    %p103 = por %p101, %p102
    %p104 = scmp.ne.s32.totalorder %s92, %s93
    %p105 = scmp.eq.s32.totalorder %s20, 1
    %p106 = por %p104, %p105
    %p108 = scmp.ne.s32.totalorder %s93, %s107
    %p109 = scmp.eq.s32.totalorder %s20, 0
    %p110 = por %p108, %p109
    %s112 = sadd.s32 %s111, 1
    %p115 = scmp.eq.s32.totalorder %s14, 1
    %p116 = scmp.ne.s32.totalorder %s111, %s113
    %p117 = scmp.eq.s32.totalorder %s14, 0
    %p118 = por %p116, %p117
    %p119 = scmp.ne.s32.totalorder %s111, %s113
    %p120 = scmp.eq.s32.totalorder %s19, 1
    %p121 = por %p119, %p120
    %p122 = scmp.ne.s32.totalorder %s113, %s114
    %p123 = scmp.eq.s32.totalorder %s19, 0
    %p124 = por %p122, %p123
    %p125 = scmp.ne.s32.totalorder %s113, %s114
    %p126 = scmp.eq.s32.totalorder %s20, 1
    %p127 = por %p125, %p126
    %p129 = scmp.ne.s32.totalorder %s114, %s128
    %p130 = scmp.eq.s32.totalorder %s20, 0
    %p131 = por %p129, %p130
    %s133 = sadd.s32 %s132, 1
    %p136 = scmp.eq.s32.totalorder %s14, 1
    %p137 = scmp.ne.s32.totalorder %s132, %s134
    %p138 = scmp.eq.s32.totalorder %s14, 0
    %p139 = por %p137, %p138
    %p140 = scmp.ne.s32.totalorder %s132, %s134
    %p141 = scmp.eq.s32.totalorder %s19, 1
    %p142 = por %p140, %p141
    %p143 = scmp.ne.s32.totalorder %s134, %s135
    %p144 = scmp.eq.s32.totalorder %s19, 0
    %p145 = por %p143, %p144
    %p146 = scmp.ne.s32.totalorder %s134, %s135
    %p147 = scmp.eq.s32.totalorder %s20, 1
    %p148 = por %p146, %p147
    %p150 = scmp.ne.s32.totalorder %s135, %s149
    %p151 = scmp.eq.s32.totalorder %s20, 0
    %p152 = por %p150, %p151
    %s153 = ssub.s32 %s14, %s21
    %p154 = scmp.eq.s32.totalorder %s153, 0
    %s156 = sadd.s32 %s155, 1
    %s157 = scalar_select %p154, %s155, %s156
    %p160 = pneg %p154
    %p161 = scmp.eq.s32.totalorder %s14, 1
    %p162 = por %p160, %p161
    %p163 = scmp.ne.s32.totalorder %s155, %s158
    %p164 = scmp.eq.s32.totalorder %s14, 0
    %p165 = por %p163, %p164
    %p166 = scmp.ne.s32.totalorder %s155, %s158
    %p167 = scmp.eq.s32.totalorder %s19, 1
    %p168 = por %p166, %p167
    %p169 = scmp.ne.s32.totalorder %s158, %s159
    %p170 = scmp.eq.s32.totalorder %s19, 0
    %p171 = por %p169, %p170
    %p172 = scmp.ne.s32.totalorder %s158, %s159
    %p173 = scmp.eq.s32.totalorder %s20, 1
    %p174 = por %p172, %p173
    %p176 = scmp.ne.s32.totalorder %s159, %s175
    %p177 = scmp.eq.s32.totalorder %s20, 0
    %p178 = por %p176, %p177
    %s179 = ssub.s32 %s14, %s21
    %p180 = scmp.eq.s32.totalorder %s179, 0
    %s182 = sadd.s32 %s181, 1
    %s183 = scalar_select %p180, %s181, %s182
    %p186 = pneg %p180
    %p187 = scmp.eq.s32.totalorder %s14, 1
    %p188 = por %p186, %p187
    %p189 = scmp.ne.s32.totalorder %s181, %s184
    %p190 = scmp.eq.s32.totalorder %s14, 0
    %p191 = por %p189, %p190
    %p192 = scmp.ne.s32.totalorder %s181, %s184
    %p193 = scmp.eq.s32.totalorder %s19, 1
    %p194 = por %p192, %p193
    %p195 = scmp.ne.s32.totalorder %s184, %s185
    %p196 = scmp.eq.s32.totalorder %s19, 0
    %p197 = por %p195, %p196
    %p198 = scmp.ne.s32.totalorder %s184, %s185
    %p199 = scmp.eq.s32.totalorder %s20, 1
    %p200 = por %p198, %p199
    %p202 = scmp.ne.s32.totalorder %s185, %s201
    %p203 = scmp.eq.s32.totalorder %s20, 0
    %p204 = por %p202, %p203
    %p205 = scmp.le.s32.totalorder 1, %s14
    %p206 = scmp.lt.s32.totalorder %s14, 3
    %p207 = pnand %p205, %p206
    %p208 = pneg %p207
    // Predicated region
    $region9: #{block_forward.5} parent=5 // pred_check
      _
    $region10: #{block_forward.5} parent=5 // pred_check_branch
      %210 = sbr.rel (%p207) target = $region12
    $region11: #{block_forward.5} parent=5 // pred_region
      %s211 = ssub.s32 %s14, 1
      // Predicated region
      $region13: #{block_forward.5} parent=11 // pred_check
        %p212 = pneg %p61
      $region14: #{block_forward.5} parent=11 // pred_check_branch
        %214 = sbr.rel (%p212) target = $region16
      $region15: #{block_forward.5} parent=11 // pred_region
        _
      $region16: #{block_forward.5} parent=11 // pred_fallthru
        _
      // Predicated region
      $region17: #{block_forward.5} parent=11 // pred_check
        %p215 = pneg %p82
      $region18: #{block_forward.5} parent=11 // pred_check_branch
        %217 = sbr.rel (%p215) target = $region20
      $region19: #{block_forward.5} parent=11 // pred_region
        _
      $region20: #{block_forward.5} parent=11 // pred_fallthru
        _
      // Predicated region
      $region21: #{block_forward.5} parent=11 // pred_check
        %p218 = pneg %p103
      $region22: #{block_forward.5} parent=11 // pred_check_branch
        %220 = sbr.rel (%p218) target = $region24
      $region23: #{block_forward.5} parent=11 // pred_region
        _
      $region24: #{block_forward.5} parent=11 // pred_fallthru
        _
      // Predicated region
      $region25: #{block_forward.5} parent=11 // pred_check
        %p221 = pneg %p124
      $region26: #{block_forward.5} parent=11 // pred_check_branch
        %223 = sbr.rel (%p221) target = $region28
      $region27: #{block_forward.5} parent=11 // pred_region
        _
      $region28: #{block_forward.5} parent=11 // pred_fallthru
        _
      // Predicated region
      $region29: #{block_forward.5} parent=11 // pred_check
        %p224 = pneg %p145
      $region30: #{block_forward.5} parent=11 // pred_check_branch
        %226 = sbr.rel (%p224) target = $region32
      $region31: #{block_forward.5} parent=11 // pred_region
        _
      $region32: #{block_forward.5} parent=11 // pred_fallthru
        _
    $region12: #{block_forward.5} parent=5 // pred_fallthru
      _
    %p227 = scmp.lt.s32.totalorder %s14, 2
    // Predicated region
    $region33: #{block_forward.5} parent=5 // pred_check
      %p228 = pneg %p227
    $region34: #{block_forward.5} parent=5 // pred_check_branch
      %230 = sbr.rel (%p228) target = $region36
    $region35: #{block_forward.5} parent=5 // pred_region
      // Predicated region
      $region37: #{block_forward.5} parent=35 // pred_check
        %p231 = pneg %p34
      $region38: #{block_forward.5} parent=35 // pred_check_branch
        %233 = sbr.rel (%p231) target = $region40
      $region39: #{block_forward.5} parent=35 // pred_region
        %p234 = scmp.lt.s32.totalorder %s14, 1
        %s235 = scalar_select %p234, %s14, 1
        %s236 = smul.addr %s235, 2
        %s237 = smul.addr %s236, 2
        %s238 = scalar_lea.vmem %s0, %s237
      $region40: #{block_forward.5} parent=35 // pred_fallthru
        _
    $region36: #{block_forward.5} parent=5 // pred_fallthru
      _
    %p239 = scmp.le.s32.totalorder 1, %s14
    %p240 = scmp.lt.s32.totalorder %s14, 3
    %p241 = pnand %p239, %p240
    %p242 = pneg %p241
    // Predicated region
    $region41: #{block_forward.5} parent=5 // pred_check
      _
    $region42: #{block_forward.5} parent=5 // pred_check_branch
      %244 = sbr.rel (%p241) target = $region44
    $region43: #{block_forward.5} parent=5 // pred_region
      %s245 = ssub.s32 %s14, 1
      %p246 = scmp.lt.s32.totalorder %s19, 1
      %s247 = scalar_select %p246, %s19, 1
      %s248 = smul.addr %s247, 2
      %s249 = smul.addr %s248, 2
      %s250 = scalar_lea.vmem %s0, %s249
      %p251 = pneg %p40
      %p252 = pneg %p37
      %p253 = pneg %p61
      %p254 = pneg %p58
      %p255 = pneg %p82
      %p256 = pneg %p79
      %p257 = pneg %p103
      %p258 = pneg %p100
      %p259 = pneg %p124
      %p260 = pneg %p121
      %p261 = pneg %p145
      %p262 = pneg %p142
      %p263 = pneg %p171
      %p264 = pneg %p168
      %p265 = scmp.lt.s32.totalorder %s19, 1
      %s266 = scalar_select %p265, %s19, 1
      %s267 = smul.addr %s266, 2
      %s268 = smul.addr %s267, 2
      %s269 = scalar_lea.vmem %s6, %s268
      %p270 = pneg %p197
      %p271 = pneg %p194
      %p272 = scmp.lt.s32.totalorder %s19, 1
      %s273 = scalar_select %p272, %s19, 1
      %s274 = smul.addr %s273, 4
      %s275 = scalar_lea.vmem %s7, %s274
      %p276 = scmp.lt.s32.totalorder %s19, 1
      %s277 = scalar_select %p276, %s19, 1
      %s278 = smul.addr %s277, 2
      %s279 = smul.addr %s278, 2
      %s280 = scalar_lea.vmem %s0, %s279
      %p281 = scmp.lt.s32.totalorder %s19, 1
      %s282 = scalar_select %p281, %s19, 1
      %s283 = smul.addr %s282, 2
      %s284 = smul.addr %s283, 2
      %s285 = scalar_lea.vmem %s6, %s284
      %p286 = scmp.lt.s32.totalorder %s19, 1
      %s287 = scalar_select %p286, %s19, 1
      %s288 = smul.addr %s287, 4
      %s289 = scalar_lea.vmem %s7, %s288
      %v291 = vld [vmem:[%s280] sm:$0xf]
      %v292 = vunpack.c.l.bf16 %v291
      %v293 = vld [vmem:[%s1] sm:$0xf]
      %295 = vset.pattern.permute.xlu0 0
      %296 = vperm.xlu0 %295, %v293
      %v297 = vpop.permute.xlu0 %296
      %v299 = vunpack.c.l.s4 839922192
      %v300 = vunpack.c.0.s8 %v299
      %v301 = vlaneseq
      %v302 = vshrl.u32 %v301, 7
      %v303 = vsub.s32 %v300, %v302
      %v304 = vrot.slane %v297, %v303
      %v306 = vmul.f32 %v292, %v304
      %v307 = vld [vmem:[%s2] sm:$0xf]
      %309 = vset.pattern.permute.xlu0 0
      %310 = vperm.xlu0 %309, %v307
      %v311 = vpop.permute.xlu0 %310
      %v313 = vunpack.c.l.s4 839922192
      %v314 = vunpack.c.0.s8 %v313
      %v315 = vlaneseq
      %v316 = vshrl.u32 %v315, 7
      %v317 = vsub.s32 %v314, %v316
      %v318 = vrot.slane %v311, %v317
      %v320 = vadd.f32 %v306, %v318
      %v321 = vmax.f32 %v320, 0.0
      %v323 = vcombine.high %v321, %v321
      %325 = vrot.lane.b32.xlu0 %v321, 17
      %v326 = vpop.permute.xlu0 %325
      %327 = vrot.lane.b32.xlu0 %v323, 17
      %v328 = vpop.permute.xlu0 %327
      %v329 = vlaneseq
      %v330 = vand.u32 %v329, 127
      %vm331 = vcmp.lt.s32.totalorder %v330, 17
      %v332 = vsel %vm331, %v326, %v328
      %v333 = vsel %vm331, %v328, %v326
      %v334 = vld [vmem:[%s5] ss:$8 sm:$0x3]
      %v336 = vlaneseq
      %v337 = vshrl.u32 %v336, 7
      %v338 = vsub.s32 0, %v337
      %v339 = vrot.slane %v334, %v338
      %v340 = vlaneseq
      %v341 = vshrl.u32 %v340, 7
      %v342 = vsub.s32 1, %v341
      %v343 = vrot.slane %v334, %v342
      %v346 = vmul.f32 %v333, %v339
      %v347 = vmul.f32 %v332, %v343
      %v348 = vld [vmem:[%s3] sm:$0x3]
      %v349 = vpack.c.bf16 %v346, %v346
      %v350 = vpack.c.bf16 %v347, %v347
      %351 = vrot.lane.b32.xlu0 %v321, 16
      %v352 = vpop.permute.xlu0 %351
      %353 = vrot.lane.b32.xlu0 %v323, 16
      %v354 = vpop.permute.xlu0 %353
      %vm355 = vcmp.lt.s32.totalorder %v330, 16
      %v356 = vsel %vm355, %v352, %v354
      %v357 = vsel %vm355, %v354, %v352
      %s358 = scalar_lea.vmem %s5, 1
      %v359 = vld [vmem:[%s358] ss:$8 sm:$0x3]
      %v361 = vlaneseq
      %v362 = vshrl.u32 %v361, 7
      %v363 = vsub.s32 0, %v362
      %v364 = vrot.slane %v359, %v363
      %v365 = vlaneseq
      %v366 = vshrl.u32 %v365, 7
      %v367 = vsub.s32 1, %v366
      %v368 = vrot.slane %v359, %v367
      %v371 = vmul.f32 %v357, %v364
      %v372 = vmul.f32 %v356, %v368
      %s373 = scalar_lea.vmem %s3, 2
      %v374 = vld [vmem:[%s373] sm:$0x3]
      %v375 = vpack.c.bf16 %v371, %v371
      %v376 = vpack.c.bf16 %v372, %v372
      %vm377 = vcmask 31744
      %v379 = vsel %vm377, %v374, 0
      %vm381 = vcmask 1041408
      %v383 = vsel %vm381, %v375, 0
      %v386 = vsel %vm381, %v376, 0
      %388 = vmatprep.subr.bf16.mxu0 0
      %389 = vmatpush1.bf16.msra.mxu0 0
      %390 = vmatprep.subr.bf16.mxu0 0
      %391 = vmatpush1.bf16.msra.mxu0 0
      %392 = vmatprep.subr.bf16.mxu0 0
      %393 = vmatpush1.bf16.msra.mxu0 0
      %394 = vmatprep.subr.bf16.mxu0 0
      %395 = vmatpush1.bf16.msra.mxu0 0
      %396 = vmatprep.subr.bf16.mxu0 0
      %397 = vmatpush1.bf16.msra.mxu0 0
      %398 = vmatprep.subr.bf16.mxu0 0
      %399 = vmatpush1.bf16.msra.mxu0 0
      %400 = vmatprep.subr.bf16.mxu0 0
      %401 = vmatpush1.bf16.msra.mxu0 0
      %402 = vmatprep.subr.bf16.mxu0 %v386
      %403 = vmatpush1.bf16.msra.mxu0 %v383
      %404 = vmatprep.subr.bf16.mxu0 0
      %405 = vmatpush2.bf16.msra.mxu0 0
      %406 = vmatprep.subr.bf16.mxu0 0
      %407 = vmatpush2.bf16.msra.mxu0 0
      %408 = vmatprep.subr.bf16.mxu0 0
      %409 = vmatpush2.bf16.msra.mxu0 0
      %410 = vmatprep.subr.bf16.mxu0 0
      %411 = vmatpush2.bf16.msra.mxu0 0
      %412 = vmatprep.subr.bf16.mxu0 0
      %413 = vmatpush2.bf16.msra.mxu0 0
      %414 = vmatprep.subr.bf16.mxu0 0
      %415 = vmatpush2.bf16.msra.mxu0 0
      %416 = vmatprep.subr.bf16.mxu0 0
      %417 = vmatpush2.bf16.msra.mxu0 0
      %418 = vmatprep.subr.bf16.mxu0 0
      %419 = vmatpush2.bf16.msra.mxu0 0
      %420 = vmatprep.mubr.bf16.mxu0 0
      %421 = vmatmul.mubr.bf16.gmra.mxu0 %v379
      %v422 = vpop.f32.mrf.mxu0
      %v423 = vadd.f32 0.0, %v422
      %v424 = vpop.f32.mrf.mxu0
      %v425 = vadd.f32 0.0, %v424
      %v426 = vpop.f32.mrf.mxu0
      %v427 = vpop.f32.mrf.mxu0
      %428 = vdwg.mxu0
      %v430 = vsel %vm377, %v348, 0
      %v433 = vsel %vm381, %v349, 0
      %v436 = vsel %vm381, %v350, 0
      %438 = vmatprep.subr.bf16.mxu0 0
      %439 = vmatpush1.bf16.msra.mxu0 0
      %440 = vmatprep.subr.bf16.mxu0 0
      %441 = vmatpush1.bf16.msra.mxu0 0
      %442 = vmatprep.subr.bf16.mxu0 0
      %443 = vmatpush1.bf16.msra.mxu0 0
      %444 = vmatprep.subr.bf16.mxu0 0
      %445 = vmatpush1.bf16.msra.mxu0 0
      %446 = vmatprep.subr.bf16.mxu0 0
      %447 = vmatpush1.bf16.msra.mxu0 0
      %448 = vmatprep.subr.bf16.mxu0 0
      %449 = vmatpush1.bf16.msra.mxu0 0
      %450 = vmatprep.subr.bf16.mxu0 0
      %451 = vmatpush1.bf16.msra.mxu0 0
      %452 = vmatprep.subr.bf16.mxu0 %v436
      %453 = vmatpush1.bf16.msra.mxu0 %v433
      %454 = vmatprep.subr.bf16.mxu0 0
      %455 = vmatpush2.bf16.msra.mxu0 0
      %456 = vmatprep.subr.bf16.mxu0 0
      %457 = vmatpush2.bf16.msra.mxu0 0
      %458 = vmatprep.subr.bf16.mxu0 0
      %459 = vmatpush2.bf16.msra.mxu0 0
      %460 = vmatprep.subr.bf16.mxu0 0
      %461 = vmatpush2.bf16.msra.mxu0 0
      %462 = vmatprep.subr.bf16.mxu0 0
      %463 = vmatpush2.bf16.msra.mxu0 0
      %464 = vmatprep.subr.bf16.mxu0 0
      %465 = vmatpush2.bf16.msra.mxu0 0
      %466 = vmatprep.subr.bf16.mxu0 0
      %467 = vmatpush2.bf16.msra.mxu0 0
      %468 = vmatprep.subr.bf16.mxu0 0
      %469 = vmatpush2.bf16.msra.mxu0 0
      %470 = vmatprep.mubr.bf16.mxu0 0
      %471 = vmatmul.mubr.bf16.gmra.mxu0 %v430
      %v472 = vpop.f32.mrf.mxu0
      %v473 = vadd.f32 %v423, %v472
      %v474 = vpop.f32.mrf.mxu0
      %v475 = vadd.f32 %v425, %v474
      %v476 = vpop.f32.mrf.mxu0
      %v477 = vpop.f32.mrf.mxu0
      %478 = vdwg.mxu0
      %479 = vrot.lane.b32.xlu0 %v321, 15
      %v480 = vpop.permute.xlu0 %479
      %481 = vrot.lane.b32.xlu0 %v323, 15
      %v482 = vpop.permute.xlu0 %481
      %vm483 = vcmp.lt.s32.totalorder %v330, 15
      %v484 = vsel %vm483, %v480, %v482
      %v485 = vsel %vm483, %v482, %v480
      %s486 = scalar_lea.vmem %s5, 2
      %v487 = vld [vmem:[%s486] ss:$8 sm:$0x3]
      %v489 = vlaneseq
      %v490 = vshrl.u32 %v489, 7
      %v491 = vsub.s32 0, %v490
      %v492 = vrot.slane %v487, %v491
      %v493 = vlaneseq
      %v494 = vshrl.u32 %v493, 7
      %v495 = vsub.s32 1, %v494
      %v496 = vrot.slane %v487, %v495
      %v499 = vmul.f32 %v485, %v492
      %v500 = vmul.f32 %v484, %v496
      %s501 = scalar_lea.vmem %s3, 4
      %v502 = vld [vmem:[%s501] sm:$0x3]
      %v503 = vpack.c.bf16 %v499, %v499
      %v504 = vpack.c.bf16 %v500, %v500
      %v506 = vsel %vm377, %v502, 0
      %v509 = vsel %vm381, %v503, 0
      %v512 = vsel %vm381, %v504, 0
      %514 = vmatprep.subr.bf16.mxu0 0
      %515 = vmatpush1.bf16.msra.mxu0 0
      %516 = vmatprep.subr.bf16.mxu0 0
      %517 = vmatpush1.bf16.msra.mxu0 0
      %518 = vmatprep.subr.bf16.mxu0 0
      %519 = vmatpush1.bf16.msra.mxu0 0
      %520 = vmatprep.subr.bf16.mxu0 0
      %521 = vmatpush1.bf16.msra.mxu0 0
      %522 = vmatprep.subr.bf16.mxu0 0
      %523 = vmatpush1.bf16.msra.mxu0 0
      %524 = vmatprep.subr.bf16.mxu0 0
      %525 = vmatpush1.bf16.msra.mxu0 0
      %526 = vmatprep.subr.bf16.mxu0 0
      %527 = vmatpush1.bf16.msra.mxu0 0
      %528 = vmatprep.subr.bf16.mxu0 %v512
      %529 = vmatpush1.bf16.msra.mxu0 %v509
      %530 = vmatprep.subr.bf16.mxu0 0
      %531 = vmatpush2.bf16.msra.mxu0 0
      %532 = vmatprep.subr.bf16.mxu0 0
      %533 = vmatpush2.bf16.msra.mxu0 0
      %534 = vmatprep.subr.bf16.mxu0 0
      %535 = vmatpush2.bf16.msra.mxu0 0
      %536 = vmatprep.subr.bf16.mxu0 0
      %537 = vmatpush2.bf16.msra.mxu0 0
      %538 = vmatprep.subr.bf16.mxu0 0
      %539 = vmatpush2.bf16.msra.mxu0 0
      %540 = vmatprep.subr.bf16.mxu0 0
      %541 = vmatpush2.bf16.msra.mxu0 0
      %542 = vmatprep.subr.bf16.mxu0 0
      %543 = vmatpush2.bf16.msra.mxu0 0
      %544 = vmatprep.subr.bf16.mxu0 0
      %545 = vmatpush2.bf16.msra.mxu0 0
      %546 = vmatprep.mubr.bf16.mxu0 0
      %547 = vmatmul.mubr.bf16.gmra.mxu0 %v506
      %v548 = vpop.f32.mrf.mxu0
      %v549 = vadd.f32 0.0, %v548
      %v550 = vpop.f32.mrf.mxu0
      %v551 = vadd.f32 0.0, %v550
      %v552 = vpop.f32.mrf.mxu0
      %v553 = vpop.f32.mrf.mxu0
      %554 = vdwg.mxu0
      %v555 = vadd.f32 %v473, %v549
      %v556 = vadd.f32 %v475, %v551
      %557 = vrot.lane.b32.xlu0 %v321, 1
      %v558 = vpop.permute.xlu0 %557
      %559 = vrot.lane.b32.xlu0 %v323, 1
      %v560 = vpop.permute.xlu0 %559
      %vm561 = vcmp.lt.s32.totalorder %v330, 1
      %v562 = vsel %vm561, %v558, %v560
      %v563 = vsel %vm561, %v560, %v558
      %s564 = scalar_lea.vmem %s5, 3
      %v565 = vld [vmem:[%s564] ss:$8 sm:$0x3]
      %v567 = vlaneseq
      %v568 = vshrl.u32 %v567, 7
      %v569 = vsub.s32 0, %v568
      %v570 = vrot.slane %v565, %v569
      %v571 = vlaneseq
      %v572 = vshrl.u32 %v571, 7
      %v573 = vsub.s32 1, %v572
      %v574 = vrot.slane %v565, %v573
      %v577 = vmul.f32 %v563, %v570
      %v578 = vmul.f32 %v562, %v574
      %s579 = scalar_lea.vmem %s3, 6
      %v580 = vld [vmem:[%s579] sm:$0x3]
      %v581 = vpack.c.bf16 %v577, %v577
      %v582 = vpack.c.bf16 %v578, %v578
      %v584 = vsel %vm377, %v580, 0
      %v587 = vsel %vm381, %v581, 0
      %v590 = vsel %vm381, %v582, 0
      %592 = vmatprep.subr.bf16.mxu0 0
      %593 = vmatpush1.bf16.msra.mxu0 0
      %594 = vmatprep.subr.bf16.mxu0 0
      %595 = vmatpush1.bf16.msra.mxu0 0
      %596 = vmatprep.subr.bf16.mxu0 0
      %597 = vmatpush1.bf16.msra.mxu0 0
      %598 = vmatprep.subr.bf16.mxu0 0
      %599 = vmatpush1.bf16.msra.mxu0 0
      %600 = vmatprep.subr.bf16.mxu0 0
      %601 = vmatpush1.bf16.msra.mxu0 0
      %602 = vmatprep.subr.bf16.mxu0 0
      %603 = vmatpush1.bf16.msra.mxu0 0
      %604 = vmatprep.subr.bf16.mxu0 0
      %605 = vmatpush1.bf16.msra.mxu0 0
      %606 = vmatprep.subr.bf16.mxu0 %v590
      %607 = vmatpush1.bf16.msra.mxu0 %v587
      %608 = vmatprep.subr.bf16.mxu0 0
      %609 = vmatpush2.bf16.msra.mxu0 0
      %610 = vmatprep.subr.bf16.mxu0 0
      %611 = vmatpush2.bf16.msra.mxu0 0
      %612 = vmatprep.subr.bf16.mxu0 0
      %613 = vmatpush2.bf16.msra.mxu0 0
      %614 = vmatprep.subr.bf16.mxu0 0
      %615 = vmatpush2.bf16.msra.mxu0 0
      %616 = vmatprep.subr.bf16.mxu0 0
      %617 = vmatpush2.bf16.msra.mxu0 0
      %618 = vmatprep.subr.bf16.mxu0 0
      %619 = vmatpush2.bf16.msra.mxu0 0
      %620 = vmatprep.subr.bf16.mxu0 0
      %621 = vmatpush2.bf16.msra.mxu0 0
      %622 = vmatprep.subr.bf16.mxu0 0
      %623 = vmatpush2.bf16.msra.mxu0 0
      %624 = vmatprep.mubr.bf16.mxu0 0
      %625 = vmatmul.mubr.bf16.gmra.mxu0 %v584
      %v626 = vpop.f32.mrf.mxu0
      %v627 = vadd.f32 0.0, %v626
      %v628 = vpop.f32.mrf.mxu0
      %v629 = vadd.f32 0.0, %v628
      %v630 = vpop.f32.mrf.mxu0
      %v631 = vpop.f32.mrf.mxu0
      %632 = vdwg.mxu0
      %v633 = vadd.f32 %v555, %v627
      %v634 = vadd.f32 %v556, %v629
      %s635 = scalar_lea.vmem %s5, 4
      %v636 = vld [vmem:[%s635] ss:$8 sm:$0x3]
      %v638 = vlaneseq
      %v639 = vshrl.u32 %v638, 7
      %v640 = vsub.s32 0, %v639
      %v641 = vrot.slane %v636, %v640
      %v642 = vlaneseq
      %v643 = vshrl.u32 %v642, 7
      %v644 = vsub.s32 1, %v643
      %v645 = vrot.slane %v636, %v644
      %v646 = vcombine.low %v641, %v645
      %v648 = vmul.f32 %v321, %v646
      %s649 = scalar_lea.vmem %s3, 8
      %v650 = vld [vmem:[%s649] sm:$0x3]
      %v652 = vcombine.high %v648, %v648
      %v654 = vpack.c.bf16 %v648, %v648
      %v655 = vpack.c.bf16 %v652, %v652
      %v657 = vsel %vm377, %v650, 0
      %v660 = vsel %vm381, %v654, 0
      %v663 = vsel %vm381, %v655, 0
      %665 = vmatprep.subr.bf16.mxu0 0
      %666 = vmatpush1.bf16.msra.mxu0 0
      %667 = vmatprep.subr.bf16.mxu0 0
      %668 = vmatpush1.bf16.msra.mxu0 0
      %669 = vmatprep.subr.bf16.mxu0 0
      %670 = vmatpush1.bf16.msra.mxu0 0
      %671 = vmatprep.subr.bf16.mxu0 0
      %672 = vmatpush1.bf16.msra.mxu0 0
      %673 = vmatprep.subr.bf16.mxu0 0
      %674 = vmatpush1.bf16.msra.mxu0 0
      %675 = vmatprep.subr.bf16.mxu0 0
      %676 = vmatpush1.bf16.msra.mxu0 0
      %677 = vmatprep.subr.bf16.mxu0 0
      %678 = vmatpush1.bf16.msra.mxu0 0
      %679 = vmatprep.subr.bf16.mxu0 %v663
      %680 = vmatpush1.bf16.msra.mxu0 %v660
      %681 = vmatprep.subr.bf16.mxu0 0
      %682 = vmatpush2.bf16.msra.mxu0 0
      %683 = vmatprep.subr.bf16.mxu0 0
      %684 = vmatpush2.bf16.msra.mxu0 0
      %685 = vmatprep.subr.bf16.mxu0 0
      %686 = vmatpush2.bf16.msra.mxu0 0
      %687 = vmatprep.subr.bf16.mxu0 0
      %688 = vmatpush2.bf16.msra.mxu0 0
      %689 = vmatprep.subr.bf16.mxu0 0
      %690 = vmatpush2.bf16.msra.mxu0 0
      %691 = vmatprep.subr.bf16.mxu0 0
      %692 = vmatpush2.bf16.msra.mxu0 0
      %693 = vmatprep.subr.bf16.mxu0 0
      %694 = vmatpush2.bf16.msra.mxu0 0
      %695 = vmatprep.subr.bf16.mxu0 0
      %696 = vmatpush2.bf16.msra.mxu0 0
      %697 = vmatprep.mubr.bf16.mxu0 0
      %698 = vmatmul.mubr.bf16.gmra.mxu0 %v657
      %v699 = vpop.f32.mrf.mxu0
      %v700 = vadd.f32 0.0, %v699
      %v701 = vpop.f32.mrf.mxu0
      %v702 = vadd.f32 0.0, %v701
      %v703 = vpop.f32.mrf.mxu0
      %v704 = vpop.f32.mrf.mxu0
      %705 = vdwg.mxu0
      %v706 = vadd.f32 %v633, %v700
      %v707 = vadd.f32 %v634, %v702
      %708 = vrot.lane.b32.xlu0 %v321, 127
      %v709 = vpop.permute.xlu0 %708
      %710 = vrot.lane.b32.xlu0 %v323, 127
      %v711 = vpop.permute.xlu0 %710
      %vm712 = vcmp.lt.s32.totalorder %v330, 127
      %v713 = vsel %vm712, %v709, %v711
      %v714 = vsel %vm712, %v711, %v709
      %s715 = scalar_lea.vmem %s5, 5
      %v716 = vld [vmem:[%s715] ss:$8 sm:$0x3]
      %v718 = vlaneseq
      %v719 = vshrl.u32 %v718, 7
      %v720 = vsub.s32 0, %v719
      %v721 = vrot.slane %v716, %v720
      %v722 = vlaneseq
      %v723 = vshrl.u32 %v722, 7
      %v724 = vsub.s32 1, %v723
      %v725 = vrot.slane %v716, %v724
      %v728 = vmul.f32 %v713, %v721
      %v729 = vmul.f32 %v714, %v725
      %s730 = scalar_lea.vmem %s3, 10
      %v731 = vld [vmem:[%s730] sm:$0x3]
      %v732 = vpack.c.bf16 %v728, %v728
      %v733 = vpack.c.bf16 %v729, %v729
      %v735 = vsel %vm377, %v731, 0
      %v738 = vsel %vm381, %v732, 0
      %v741 = vsel %vm381, %v733, 0
      %743 = vmatprep.subr.bf16.mxu0 0
      %744 = vmatpush1.bf16.msra.mxu0 0
      %745 = vmatprep.subr.bf16.mxu0 0
      %746 = vmatpush1.bf16.msra.mxu0 0
      %747 = vmatprep.subr.bf16.mxu0 0
      %748 = vmatpush1.bf16.msra.mxu0 0
      %749 = vmatprep.subr.bf16.mxu0 0
      %750 = vmatpush1.bf16.msra.mxu0 0
      %751 = vmatprep.subr.bf16.mxu0 0
      %752 = vmatpush1.bf16.msra.mxu0 0
      %753 = vmatprep.subr.bf16.mxu0 0
      %754 = vmatpush1.bf16.msra.mxu0 0
      %755 = vmatprep.subr.bf16.mxu0 0
      %756 = vmatpush1.bf16.msra.mxu0 0
      %757 = vmatprep.subr.bf16.mxu0 %v741
      %758 = vmatpush1.bf16.msra.mxu0 %v738
      %759 = vmatprep.subr.bf16.mxu0 0
      %760 = vmatpush2.bf16.msra.mxu0 0
      %761 = vmatprep.subr.bf16.mxu0 0
      %762 = vmatpush2.bf16.msra.mxu0 0
      %763 = vmatprep.subr.bf16.mxu0 0
      %764 = vmatpush2.bf16.msra.mxu0 0
      %765 = vmatprep.subr.bf16.mxu0 0
      %766 = vmatpush2.bf16.msra.mxu0 0
      %767 = vmatprep.subr.bf16.mxu0 0
      %768 = vmatpush2.bf16.msra.mxu0 0
      %769 = vmatprep.subr.bf16.mxu0 0
      %770 = vmatpush2.bf16.msra.mxu0 0
      %771 = vmatprep.subr.bf16.mxu0 0
      %772 = vmatpush2.bf16.msra.mxu0 0
      %773 = vmatprep.subr.bf16.mxu0 0
      %774 = vmatpush2.bf16.msra.mxu0 0
      %775 = vmatprep.mubr.bf16.mxu0 0
      %776 = vmatmul.mubr.bf16.gmra.mxu0 %v735
      %v777 = vpop.f32.mrf.mxu0
      %v778 = vadd.f32 0.0, %v777
      %v779 = vpop.f32.mrf.mxu0
      %v780 = vadd.f32 0.0, %v779
      %v781 = vpop.f32.mrf.mxu0
      %v782 = vpop.f32.mrf.mxu0
      %783 = vdwg.mxu0
      %v784 = vadd.f32 %v706, %v778
      %v785 = vadd.f32 %v707, %v780
      %786 = vrot.lane.b32.xlu0 %v321, 113
      %v787 = vpop.permute.xlu0 %786
      %788 = vrot.lane.b32.xlu0 %v323, 113
      %v789 = vpop.permute.xlu0 %788
      %vm790 = vcmp.lt.s32.totalorder %v330, 113
      %v791 = vsel %vm790, %v787, %v789
      %v792 = vsel %vm790, %v789, %v787
      %s793 = scalar_lea.vmem %s5, 6
      %v794 = vld [vmem:[%s793] ss:$8 sm:$0x3]
      %v796 = vlaneseq
      %v797 = vshrl.u32 %v796, 7
      %v798 = vsub.s32 0, %v797
      %v799 = vrot.slane %v794, %v798
      %v800 = vlaneseq
      %v801 = vshrl.u32 %v800, 7
      %v802 = vsub.s32 1, %v801
      %v803 = vrot.slane %v794, %v802
      %v806 = vmul.f32 %v791, %v799
      %v807 = vmul.f32 %v792, %v803
      %s808 = scalar_lea.vmem %s3, 12
      %v809 = vld [vmem:[%s808] sm:$0x3]
      %v810 = vpack.c.bf16 %v806, %v806
      %v811 = vpack.c.bf16 %v807, %v807
      %v813 = vsel %vm377, %v809, 0
      %v816 = vsel %vm381, %v810, 0
      %v819 = vsel %vm381, %v811, 0
      %821 = vmatprep.subr.bf16.mxu0 0
      %822 = vmatpush1.bf16.msra.mxu0 0
      %823 = vmatprep.subr.bf16.mxu0 0
      %824 = vmatpush1.bf16.msra.mxu0 0
      %825 = vmatprep.subr.bf16.mxu0 0
      %826 = vmatpush1.bf16.msra.mxu0 0
      %827 = vmatprep.subr.bf16.mxu0 0
      %828 = vmatpush1.bf16.msra.mxu0 0
      %829 = vmatprep.subr.bf16.mxu0 0
      %830 = vmatpush1.bf16.msra.mxu0 0
      %831 = vmatprep.subr.bf16.mxu0 0
      %832 = vmatpush1.bf16.msra.mxu0 0
      %833 = vmatprep.subr.bf16.mxu0 0
      %834 = vmatpush1.bf16.msra.mxu0 0
      %835 = vmatprep.subr.bf16.mxu0 %v819
      %836 = vmatpush1.bf16.msra.mxu0 %v816
      %837 = vmatprep.subr.bf16.mxu0 0
      %838 = vmatpush2.bf16.msra.mxu0 0
      %839 = vmatprep.subr.bf16.mxu0 0
      %840 = vmatpush2.bf16.msra.mxu0 0
      %841 = vmatprep.subr.bf16.mxu0 0
      %842 = vmatpush2.bf16.msra.mxu0 0
      %843 = vmatprep.subr.bf16.mxu0 0
      %844 = vmatpush2.bf16.msra.mxu0 0
      %845 = vmatprep.subr.bf16.mxu0 0
      %846 = vmatpush2.bf16.msra.mxu0 0
      %847 = vmatprep.subr.bf16.mxu0 0
      %848 = vmatpush2.bf16.msra.mxu0 0
      %849 = vmatprep.subr.bf16.mxu0 0
      %850 = vmatpush2.bf16.msra.mxu0 0
      %851 = vmatprep.subr.bf16.mxu0 0
      %852 = vmatpush2.bf16.msra.mxu0 0
      %853 = vmatprep.mubr.bf16.mxu0 0
      %854 = vmatmul.mubr.bf16.gmra.mxu0 %v813
      %v855 = vpop.f32.mrf.mxu0
      %v856 = vadd.f32 0.0, %v855
      %v857 = vpop.f32.mrf.mxu0
      %v858 = vadd.f32 0.0, %v857
      %v859 = vpop.f32.mrf.mxu0
      %v860 = vpop.f32.mrf.mxu0
      %861 = vdwg.mxu0
      %v862 = vadd.f32 %v784, %v856
      %v863 = vadd.f32 %v785, %v858
      %864 = vrot.lane.b32.xlu0 %v321, 112
      %v865 = vpop.permute.xlu0 %864
      %866 = vrot.lane.b32.xlu0 %v323, 112
      %v867 = vpop.permute.xlu0 %866
      %vm868 = vcmp.lt.s32.totalorder %v330, 112
      %v869 = vsel %vm868, %v865, %v867
      %v870 = vsel %vm868, %v867, %v865
      %s871 = scalar_lea.vmem %s5, 7
      %v872 = vld [vmem:[%s871] ss:$8 sm:$0x3]
      %v874 = vlaneseq
      %v875 = vshrl.u32 %v874, 7
      %v876 = vsub.s32 0, %v875
      %v877 = vrot.slane %v872, %v876
      %v878 = vlaneseq
      %v879 = vshrl.u32 %v878, 7
      %v880 = vsub.s32 1, %v879
      %v881 = vrot.slane %v872, %v880
      %v884 = vmul.f32 %v869, %v877
      %v885 = vmul.f32 %v870, %v881
      %s886 = scalar_lea.vmem %s3, 14
      %v887 = vld [vmem:[%s886] sm:$0x3]
      %v888 = vpack.c.bf16 %v884, %v884
      %v889 = vpack.c.bf16 %v885, %v885
      %v891 = vsel %vm377, %v887, 0
      %v894 = vsel %vm381, %v888, 0
      %v897 = vsel %vm381, %v889, 0
      %899 = vmatprep.subr.bf16.mxu0 0
      %900 = vmatpush1.bf16.msra.mxu0 0
      %901 = vmatprep.subr.bf16.mxu0 0
      %902 = vmatpush1.bf16.msra.mxu0 0
      %903 = vmatprep.subr.bf16.mxu0 0
      %904 = vmatpush1.bf16.msra.mxu0 0
      %905 = vmatprep.subr.bf16.mxu0 0
      %906 = vmatpush1.bf16.msra.mxu0 0
      %907 = vmatprep.subr.bf16.mxu0 0
      %908 = vmatpush1.bf16.msra.mxu0 0
      %909 = vmatprep.subr.bf16.mxu0 0
      %910 = vmatpush1.bf16.msra.mxu0 0
      %911 = vmatprep.subr.bf16.mxu0 0
      %912 = vmatpush1.bf16.msra.mxu0 0
      %913 = vmatprep.subr.bf16.mxu0 %v897
      %914 = vmatpush1.bf16.msra.mxu0 %v894
      %915 = vmatprep.subr.bf16.mxu0 0
      %916 = vmatpush2.bf16.msra.mxu0 0
      %917 = vmatprep.subr.bf16.mxu0 0
      %918 = vmatpush2.bf16.msra.mxu0 0
      %919 = vmatprep.subr.bf16.mxu0 0
      %920 = vmatpush2.bf16.msra.mxu0 0
      %921 = vmatprep.subr.bf16.mxu0 0
      %922 = vmatpush2.bf16.msra.mxu0 0
      %923 = vmatprep.subr.bf16.mxu0 0
      %924 = vmatpush2.bf16.msra.mxu0 0
      %925 = vmatprep.subr.bf16.mxu0 0
      %926 = vmatpush2.bf16.msra.mxu0 0
      %927 = vmatprep.subr.bf16.mxu0 0
      %928 = vmatpush2.bf16.msra.mxu0 0
      %929 = vmatprep.subr.bf16.mxu0 0
      %930 = vmatpush2.bf16.msra.mxu0 0
      %931 = vmatprep.mubr.bf16.mxu0 0
      %932 = vmatmul.mubr.bf16.gmra.mxu0 %v891
      %v933 = vpop.f32.mrf.mxu0
      %v934 = vadd.f32 0.0, %v933
      %v935 = vpop.f32.mrf.mxu0
      %v936 = vadd.f32 0.0, %v935
      %v937 = vpop.f32.mrf.mxu0
      %v938 = vpop.f32.mrf.mxu0
      %939 = vdwg.mxu0
      %v940 = vadd.f32 %v862, %v934
      %v941 = vadd.f32 %v863, %v936
      %942 = vrot.lane.b32.xlu0 %v321, 111
      %v943 = vpop.permute.xlu0 %942
      %944 = vrot.lane.b32.xlu0 %v323, 111
      %v945 = vpop.permute.xlu0 %944
      %vm946 = vcmp.lt.s32.totalorder %v330, 111
      %v947 = vsel %vm946, %v943, %v945
      %v948 = vsel %vm946, %v945, %v943
      %s949 = scalar_lea.vmem %s5, 16
      %v950 = vld [vmem:[%s949] ss:$8 sm:$0x3]
      %v952 = vlaneseq
      %v953 = vshrl.u32 %v952, 7
      %v954 = vsub.s32 0, %v953
      %v955 = vrot.slane %v950, %v954
      %v956 = vlaneseq
      %v957 = vshrl.u32 %v956, 7
      %v958 = vsub.s32 1, %v957
      %v959 = vrot.slane %v950, %v958
      %v962 = vmul.f32 %v947, %v955
      %v963 = vmul.f32 %v948, %v959
      %s964 = scalar_lea.vmem %s3, 16
      %v965 = vld [vmem:[%s964] sm:$0x3]
      %v966 = vpack.c.bf16 %v962, %v962
      %v967 = vpack.c.bf16 %v963, %v963
      %v969 = vsel %vm377, %v965, 0
      %v972 = vsel %vm381, %v966, 0
      %v975 = vsel %vm381, %v967, 0
      %977 = vmatprep.subr.bf16.mxu0 0
      %978 = vmatpush1.bf16.msra.mxu0 0
      %979 = vmatprep.subr.bf16.mxu0 0
      %980 = vmatpush1.bf16.msra.mxu0 0
      %981 = vmatprep.subr.bf16.mxu0 0
      %982 = vmatpush1.bf16.msra.mxu0 0
      %983 = vmatprep.subr.bf16.mxu0 0
      %984 = vmatpush1.bf16.msra.mxu0 0
      %985 = vmatprep.subr.bf16.mxu0 0
      %986 = vmatpush1.bf16.msra.mxu0 0
      %987 = vmatprep.subr.bf16.mxu0 0
      %988 = vmatpush1.bf16.msra.mxu0 0
      %989 = vmatprep.subr.bf16.mxu0 0
      %990 = vmatpush1.bf16.msra.mxu0 0
      %991 = vmatprep.subr.bf16.mxu0 %v975
      %992 = vmatpush1.bf16.msra.mxu0 %v972
      %993 = vmatprep.subr.bf16.mxu0 0
      %994 = vmatpush2.bf16.msra.mxu0 0
      %995 = vmatprep.subr.bf16.mxu0 0
      %996 = vmatpush2.bf16.msra.mxu0 0
      %997 = vmatprep.subr.bf16.mxu0 0
      %998 = vmatpush2.bf16.msra.mxu0 0
      %999 = vmatprep.subr.bf16.mxu0 0
      %1000 = vmatpush2.bf16.msra.mxu0 0
      %1001 = vmatprep.subr.bf16.mxu0 0
      %1002 = vmatpush2.bf16.msra.mxu0 0
      %1003 = vmatprep.subr.bf16.mxu0 0
      %1004 = vmatpush2.bf16.msra.mxu0 0
      %1005 = vmatprep.subr.bf16.mxu0 0
      %1006 = vmatpush2.bf16.msra.mxu0 0
      %1007 = vmatprep.subr.bf16.mxu0 0
      %1008 = vmatpush2.bf16.msra.mxu0 0
      %1009 = vmatprep.mubr.bf16.mxu0 0
      %1010 = vmatmul.mubr.bf16.gmra.mxu0 %v969
      %v1011 = vpop.f32.mrf.mxu0
      %v1012 = vadd.f32 0.0, %v1011
      %v1013 = vpop.f32.mrf.mxu0
      %v1014 = vadd.f32 0.0, %v1013
      %v1015 = vpop.f32.mrf.mxu0
      %v1016 = vpop.f32.mrf.mxu0
      %1017 = vdwg.mxu0
      %v1018 = vadd.f32 %v940, %v1012
      %v1019 = vadd.f32 %v941, %v1014
      %v1020 = vld [vmem:[%s4] sm:$0xf]
      %1022 = vset.pattern.permute.xlu0 0
      %1023 = vperm.xlu0 %1022, %v1020
      %v1024 = vpop.permute.xlu0 %1023
      %v1026 = vadd.f32 %v1018, %v1024
      %v1027 = vadd.f32 %v1019, %v1024
      %v1028 = vpack.c.bf16 %v1026, %v1026
      %v1029 = vpack.c.bf16 %v1027, %v1027
      %v1032 = vcombine.low %v1028, %v1029
      %v1034 = vunpack.c.l.s4 1983009808
      %v1035 = vunpack.c.0.s8 %v1034
      %v1036 = vlaneseq
      %v1037 = vshrl.u32 %v1036, 7
      %v1038 = vsub.s32 %v1035, %v1037
      %v1039 = vrot.slane %v1032, %v1038
      %1041 = vst [vmem:[%s285] sm:$0xf] %v1039
      %v1042 = vunpack.c.l.bf16 %v1028
      %v1043 = vunpack.c.l.bf16 %v1029
      %vm1044 = vcmask 1043456
      %v1045 = vsel %vm1044, %v1042, 0.0
      %v1046 = vsel %vm1044, %v1043, 0.0
      %v1047 = vadd.f32 %v1045, %v1046
      %1048 = vadd.xlane.f32.xlu0 %v1047
      %v1049 = vpop.xlane.xlu0 %1048
      %v1050 = vmul.f32 %v1049, 0.00390625
      %v1051 = vsub.f32 %v1042, %v1050
      %v1052 = vsub.f32 %v1043, %v1050
      %v1053 = vmul.f32 %v1051, %v1051
      %v1054 = vmul.f32 %v1052, %v1052
      %v1055 = vsel %vm1044, %v1053, 0.0
      %v1056 = vsel %vm1044, %v1054, 0.0
      %v1057 = vadd.f32 %v1055, %v1056
      %1058 = vadd.xlane.f32.xlu0 %v1057
      %v1059 = vpop.xlane.xlu0 %1058
      %vm1060 = vcmask 3072
      %1061 = vst.msk [vmem:[%s289] sm:$0xf] %vm1060, %v1049
      %vm1062 = vcmask 11272
      %1063 = vst.msk [vmem:[%s289] sm:$0xf] %vm1062, %v1059
      %p1064 = scmp.lt.s32.totalorder %s19, 1
      %s1065 = scalar_select %p1064, %s19, 1
      %s1066 = smul.addr %s1065, 2
      %s1067 = smul.addr %s1066, 2
      %s1068 = scalar_lea.vmem %s6, %s1067
      %p1069 = scmp.lt.s32.totalorder %s19, 1
      %s1070 = scalar_select %p1069, %s19, 1
      %s1071 = smul.addr %s1070, 4
      %s1072 = scalar_lea.vmem %s7, %s1071
      // Predicated region
      $region45: #{block_forward.5} parent=43 // pred_check
        %p1073 = pneg %p168
      $region46: #{block_forward.5} parent=43 // pred_check_branch
        %1075 = sbr.rel (%p1073) target = $region48
      $region47: #{block_forward.5} parent=43 // pred_region
        _
      $region48: #{block_forward.5} parent=43 // pred_fallthru
        _
      // Predicated region
      $region49: #{block_forward.5} parent=43 // pred_check
        %p1076 = pneg %p194
      $region50: #{block_forward.5} parent=43 // pred_check_branch
        %1078 = sbr.rel (%p1076) target = $region52
      $region51: #{block_forward.5} parent=43 // pred_region
        _
      $region52: #{block_forward.5} parent=43 // pred_fallthru
        _
    $region44: #{block_forward.5} parent=5 // pred_fallthru
      _
    %p1079 = scmp.le.s32.totalorder 2, %s14
    // Predicated region
    $region53: #{block_forward.5} parent=5 // pred_check
      %p1080 = pneg %p1079
    $region54: #{block_forward.5} parent=5 // pred_check_branch
      %1082 = sbr.rel (%p1080) target = $region56
    $region55: #{block_forward.5} parent=5 // pred_region
      %s1083 = ssub.s32 %s14, 2
      // Predicated region
      $region57: #{block_forward.5} parent=55 // pred_check
        %p1084 = pneg %p174
      $region58: #{block_forward.5} parent=55 // pred_check_branch
        %1086 = sbr.rel (%p1084) target = $region60
      $region59: #{block_forward.5} parent=55 // pred_region
        %p1087 = scmp.lt.s32.totalorder %s20, 1
        %s1088 = scalar_select %p1087, %s20, 1
        %s1089 = smul.addr %s1088, 2
        %s1090 = smul.addr %s1089, 2
        %s1091 = scalar_lea.vmem %s6, %s1090
      $region60: #{block_forward.5} parent=55 // pred_fallthru
        _
      // Predicated region
      $region61: #{block_forward.5} parent=55 // pred_check
        %p1092 = pneg %p200
      $region62: #{block_forward.5} parent=55 // pred_check_branch
        %1094 = sbr.rel (%p1092) target = $region64
      $region63: #{block_forward.5} parent=55 // pred_region
        %p1095 = scmp.lt.s32.totalorder %s20, 1
        %s1096 = scalar_select %p1095, %s20, 1
        %s1097 = smul.addr %s1096, 4
        %s1098 = scalar_lea.vmem %s7, %s1097
      $region64: #{block_forward.5} parent=55 // pred_fallthru
        _
    $region56: #{block_forward.5} parent=5 // pred_fallthru
      _
  $region6: #{block_forward.5} parent=0 // loop_footer
    %s18 = sadd.s32 1, %s14
  $region7: #{block_forward.5} parent=0 // loop_footer_branch
    %13 = sbr.rel target = $region3
  $region8: #{block_forward.5} parent=0 // loop_exit
    _

// kernel: block_forward.7
$region0: #{block_forward.7}
  #allocation0 [shape = 'u32[]', space=smem, size = 0x4, offset = 0x4, fixed_abs, tag = 'smem constant byte address 0x4 - core index']
  #allocation1 [shape = 'u32[144,128]{1,0:T(1,128)}', space=vmem, size = 0x12000, scoped, tag = 'internal scratch']
  %s0 = inlined_call_operand.vmem [shape: f32[2,16,256], index: 0, kind: input, shape index: {}, may-alias: {0,4}]
  %s1 = inlined_call_operand.vmem [shape: f32[16,1], index: 1, kind: input, shape index: {}]
  %s2 = inlined_call_operand.vmem [shape: f32[16,1], index: 2, kind: input, shape index: {}]
  %s3 = inlined_call_operand.vmem [shape: f32[2,16,256], index: 3, kind: input, shape index: {}]
  %s4 = inlined_call_operand.vmem [shape: f32[2,16,256], index: 4, kind: output, shape index: {}, may-alias: {0,4}]
  %s5 = sld [smem:[#allocation0]]
  $region49: #{block_forward.7} parent=0
    _
  %s7 = ssub.s32 1, %s5
  %s8 = scalar_select 0, %s7, %s5
  loop: start=0, step=1, limit=4
  $region2: #{block_forward.7} parent=0 // loop_pre_header
    _
  $region3: #{block_forward.7} parent=0 // loop_header
    %s10 = sphi 0, %s14
    %p11 = scmp.ge.s32.totalorder %s10, 4
    %s20 = sphi 0, %s22
    %s23 = sphi 0, %s20
    %s24 = sphi 0, %s23
    %s40 = sphi 0, %s24
    %s44 = sphi 0, %s44
    %s46 = sphi 0, %s44
    %s47 = sphi 0, %s46
    %s61 = sphi 0, %s47
    %s65 = sphi 0, %s65
    %s67 = sphi 0, %s65
    %s68 = sphi 0, %s67
    %s82 = sphi 0, %s68
    %s88 = sphi 0, %s90
    %s91 = sphi 0, %s88
    %s92 = sphi 0, %s91
    %s108 = sphi 0, %s92
    %s114 = sphi 0, %s116
    %s117 = sphi 0, %s114
    %s118 = sphi 0, %s117
    %s134 = sphi 0, %s118
  $region4: #{block_forward.7} parent=0 // loop_header_branch
    %13 = sbr.rel (%p11) target = $region8
  $region5: #{block_forward.7} parent=0 // loop_body
    %s15 = ssub.s32 %s10, 1
    %s16 = ssub.s32 %s10, 2
    %s17 = sadd.s32 %s10, 1
    %s18 = ssub.s32 %s10, %s17
    %p19 = scmp.eq.s32.totalorder %s18, 0
    %s21 = sadd.s32 %s20, 1
    %s22 = scalar_select %p19, %s20, %s21
    %p25 = pneg %p19
    %p26 = scmp.eq.s32.totalorder %s10, 1
    %p27 = por %p25, %p26
    %p28 = scmp.ne.s32.totalorder %s20, %s23
    %p29 = scmp.eq.s32.totalorder %s10, 0
    %p30 = por %p28, %p29
    %p31 = scmp.ne.s32.totalorder %s20, %s23
    %p32 = scmp.eq.s32.totalorder %s15, 1
    %p33 = por %p31, %p32
    %p34 = scmp.ne.s32.totalorder %s23, %s24
    %p35 = scmp.eq.s32.totalorder %s15, 0
    %p36 = por %p34, %p35
    %p37 = scmp.ne.s32.totalorder %s23, %s24
    %p38 = scmp.eq.s32.totalorder %s16, 1
    %p39 = por %p37, %p38
    %p41 = scmp.ne.s32.totalorder %s24, %s40
    %p42 = scmp.eq.s32.totalorder %s16, 0
    %p43 = por %p41, %p42
    %s45 = sadd.s32 %s44, 1
    %p48 = scmp.eq.s32.totalorder %s10, 1
    %p49 = scmp.ne.s32.totalorder %s44, %s46
    %p50 = scmp.eq.s32.totalorder %s10, 0
    %p51 = por %p49, %p50
    %p52 = scmp.ne.s32.totalorder %s44, %s46
    %p53 = scmp.eq.s32.totalorder %s15, 1
    %p54 = por %p52, %p53
    %p55 = scmp.ne.s32.totalorder %s46, %s47
    %p56 = scmp.eq.s32.totalorder %s15, 0
    %p57 = por %p55, %p56
    %p58 = scmp.ne.s32.totalorder %s46, %s47
    %p59 = scmp.eq.s32.totalorder %s16, 1
    %p60 = por %p58, %p59
    %p62 = scmp.ne.s32.totalorder %s47, %s61
    %p63 = scmp.eq.s32.totalorder %s16, 0
    %p64 = por %p62, %p63
    %s66 = sadd.s32 %s65, 1
    %p69 = scmp.eq.s32.totalorder %s10, 1
    %p70 = scmp.ne.s32.totalorder %s65, %s67
    %p71 = scmp.eq.s32.totalorder %s10, 0
    %p72 = por %p70, %p71
    %p73 = scmp.ne.s32.totalorder %s65, %s67
    %p74 = scmp.eq.s32.totalorder %s15, 1
    %p75 = por %p73, %p74
    %p76 = scmp.ne.s32.totalorder %s67, %s68
    %p77 = scmp.eq.s32.totalorder %s15, 0
    %p78 = por %p76, %p77
    %p79 = scmp.ne.s32.totalorder %s67, %s68
    %p80 = scmp.eq.s32.totalorder %s16, 1
    %p81 = por %p79, %p80
    %p83 = scmp.ne.s32.totalorder %s68, %s82
    %p84 = scmp.eq.s32.totalorder %s16, 0
    %p85 = por %p83, %p84
    %s86 = ssub.s32 %s10, %s17
    %p87 = scmp.eq.s32.totalorder %s86, 0
    %s89 = sadd.s32 %s88, 1
    %s90 = scalar_select %p87, %s88, %s89
    %p93 = pneg %p87
    %p94 = scmp.eq.s32.totalorder %s10, 1
    %p95 = por %p93, %p94
    %p96 = scmp.ne.s32.totalorder %s88, %s91
    %p97 = scmp.eq.s32.totalorder %s10, 0
    %p98 = por %p96, %p97
    %p99 = scmp.ne.s32.totalorder %s88, %s91
    %p100 = scmp.eq.s32.totalorder %s15, 1
    %p101 = por %p99, %p100
    %p102 = scmp.ne.s32.totalorder %s91, %s92
    %p103 = scmp.eq.s32.totalorder %s15, 0
    %p104 = por %p102, %p103
    %p105 = scmp.ne.s32.totalorder %s91, %s92
    %p106 = scmp.eq.s32.totalorder %s16, 1
    %p107 = por %p105, %p106
    %p109 = scmp.ne.s32.totalorder %s92, %s108
    %p110 = scmp.eq.s32.totalorder %s16, 0
    %p111 = por %p109, %p110
    %s112 = ssub.s32 %s10, %s17
    %p113 = scmp.eq.s32.totalorder %s112, 0
    %s115 = sadd.s32 %s114, 1
    %s116 = scalar_select %p113, %s114, %s115
    %p119 = pneg %p113
    %p120 = scmp.eq.s32.totalorder %s10, 1
    %p121 = por %p119, %p120
    %p122 = scmp.ne.s32.totalorder %s114, %s117
    %p123 = scmp.eq.s32.totalorder %s10, 0
    %p124 = por %p122, %p123
    %p125 = scmp.ne.s32.totalorder %s114, %s117
    %p126 = scmp.eq.s32.totalorder %s15, 1
    %p127 = por %p125, %p126
    %p128 = scmp.ne.s32.totalorder %s117, %s118
    %p129 = scmp.eq.s32.totalorder %s15, 0
    %p130 = por %p128, %p129
    %p131 = scmp.ne.s32.totalorder %s117, %s118
    %p132 = scmp.eq.s32.totalorder %s16, 1
    %p133 = por %p131, %p132
    %p135 = scmp.ne.s32.totalorder %s118, %s134
    %p136 = scmp.eq.s32.totalorder %s16, 0
    %p137 = por %p135, %p136
    %p138 = scmp.le.s32.totalorder 1, %s10
    %p139 = scmp.lt.s32.totalorder %s10, 3
    %p140 = pnand %p138, %p139
    %p141 = pneg %p140
    // Predicated region
    $region9: #{block_forward.7} parent=5 // pred_check
      _
    $region10: #{block_forward.7} parent=5 // pred_check_branch
      %143 = sbr.rel (%p140) target = $region12
    $region11: #{block_forward.7} parent=5 // pred_region
      %s144 = ssub.s32 %s10, 1
      // Predicated region
      $region13: #{block_forward.7} parent=11 // pred_check
        %p145 = pneg %p57
      $region14: #{block_forward.7} parent=11 // pred_check_branch
        %147 = sbr.rel (%p145) target = $region16
      $region15: #{block_forward.7} parent=11 // pred_region
        _
      $region16: #{block_forward.7} parent=11 // pred_fallthru
        _
      // Predicated region
      $region17: #{block_forward.7} parent=11 // pred_check
        %p148 = pneg %p78
      $region18: #{block_forward.7} parent=11 // pred_check_branch
        %150 = sbr.rel (%p148) target = $region20
      $region19: #{block_forward.7} parent=11 // pred_region
        _
      $region20: #{block_forward.7} parent=11 // pred_fallthru
        _
    $region12: #{block_forward.7} parent=5 // pred_fallthru
      _
    %p151 = scmp.lt.s32.totalorder %s10, 2
    // Predicated region
    $region21: #{block_forward.7} parent=5 // pred_check
      %p152 = pneg %p151
    $region22: #{block_forward.7} parent=5 // pred_check_branch
      %154 = sbr.rel (%p152) target = $region24
    $region23: #{block_forward.7} parent=5 // pred_region
      // Predicated region
      $region25: #{block_forward.7} parent=23 // pred_check
        %p155 = pneg %p30
      $region26: #{block_forward.7} parent=23 // pred_check_branch
        %157 = sbr.rel (%p155) target = $region28
      $region27: #{block_forward.7} parent=23 // pred_region
        %p158 = scmp.lt.s32.totalorder %s10, 1
        %s159 = scalar_select %p158, %s10, 1
        %s160 = smul.addr %s159, 4
        %s161 = smul.addr %s160, 8
        %s162 = scalar_lea.vmem %s0, %s161
      $region28: #{block_forward.7} parent=23 // pred_fallthru
        _
      // Predicated region
      $region29: #{block_forward.7} parent=23 // pred_check
        %p163 = pneg %p98
      $region30: #{block_forward.7} parent=23 // pred_check_branch
        %165 = sbr.rel (%p163) target = $region32
      $region31: #{block_forward.7} parent=23 // pred_region
        %p166 = scmp.lt.s32.totalorder %s10, 1
        %s167 = scalar_select %p166, %s10, 1
        %s168 = smul.addr %s167, 4
        %s169 = smul.addr %s168, 8
        %s170 = scalar_lea.vmem %s3, %s169
      $region32: #{block_forward.7} parent=23 // pred_fallthru
        _
    $region24: #{block_forward.7} parent=5 // pred_fallthru
      _
    %p171 = scmp.le.s32.totalorder 1, %s10
    %p172 = scmp.lt.s32.totalorder %s10, 3
    %p173 = pnand %p171, %p172
    %p174 = pneg %p173
    // Predicated region
    $region33: #{block_forward.7} parent=5 // pred_check
      _
    $region34: #{block_forward.7} parent=5 // pred_check_branch
      %176 = sbr.rel (%p173) target = $region36
    $region35: #{block_forward.7} parent=5 // pred_region
      %s177 = ssub.s32 %s10, 1
      %p178 = scmp.lt.s32.totalorder %s15, 1
      %s179 = scalar_select %p178, %s15, 1
      %s180 = smul.addr %s179, 4
      %s181 = smul.addr %s180, 8
      %s182 = scalar_lea.vmem %s0, %s181
      %p183 = pneg %p36
      %p184 = pneg %p33
      %p185 = pneg %p57
      %p186 = pneg %p54
      %p187 = pneg %p78
      %p188 = pneg %p75
      %p189 = scmp.lt.s32.totalorder %s15, 1
      %s190 = scalar_select %p189, %s15, 1
      %s191 = smul.addr %s190, 4
      %s192 = smul.addr %s191, 8
      %s193 = scalar_lea.vmem %s3, %s192
      %p194 = pneg %p104
      %p195 = pneg %p101
      %p196 = pneg %p130
      %p197 = pneg %p127
      %p198 = scmp.lt.s32.totalorder %s15, 1
      %s199 = scalar_select %p198, %s15, 1
      %s200 = smul.addr %s199, 4
      %s201 = smul.addr %s200, 8
      %s202 = scalar_lea.vmem %s4, %s201
      %p203 = scmp.lt.s32.totalorder %s15, 1
      %s204 = scalar_select %p203, %s15, 1
      %s205 = smul.addr %s204, 4
      %s206 = smul.addr %s205, 8
      %s207 = scalar_lea.vmem %s0, %s206
      %p208 = scmp.lt.s32.totalorder %s15, 1
      %s209 = scalar_select %p208, %s15, 1
      %s210 = smul.addr %s209, 4
      %s211 = smul.addr %s210, 8
      %s212 = scalar_lea.vmem %s3, %s211
      %p213 = scmp.lt.s32.totalorder %s15, 1
      %s214 = scalar_select %p213, %s15, 1
      %s215 = smul.addr %s214, 4
      %s216 = smul.addr %s215, 8
      %s217 = scalar_lea.vmem %s4, %s216
      %v218 = vld [vmem:[%s207] sm:$0xff]
      %v219 = vld [vmem:[%s207 + $0x8] sm:$0xff]
      %v220 = vld [vmem:[%s207 + $0x10] sm:$0xff]
      %v221 = vld [vmem:[%s207 + $0x18] sm:$0xff]
      %v222 = vld [vmem:[%s1] sm:$0xff]
      %v223 = vld [vmem:[%s1 + $0x8] sm:$0xff]
      %225 = vset.pattern.permute.xlu0 0
      %226 = vperm.xlu0 %225, %v222
      %v227 = vpop.permute.xlu0 %226
      %230 = vset.pattern.permute.xlu0 0
      %231 = vperm.xlu0 %230, %v223
      %v232 = vpop.permute.xlu0 %231
      %v234 = vmul.f32 %v218, %v227
      %v235 = vmul.f32 %v219, %v227
      %v236 = vmul.f32 %v220, %v232
      %v237 = vmul.f32 %v221, %v232
      %v238 = vld [vmem:[%s2] sm:$0xff]
      %v239 = vld [vmem:[%s2 + $0x8] sm:$0xff]
      %241 = vset.pattern.permute.xlu0 0
      %242 = vperm.xlu0 %241, %v238
      %v243 = vpop.permute.xlu0 %242
      %246 = vset.pattern.permute.xlu0 0
      %247 = vperm.xlu0 %246, %v239
      %v248 = vpop.permute.xlu0 %247
      %v250 = vadd.f32 %v234, %v243
      %v251 = vadd.f32 %v235, %v243
      %v252 = vadd.f32 %v236, %v248
      %v253 = vadd.f32 %v237, %v248
      %v254 = vld [vmem:[%s212] sm:$0xff]
      %v255 = vld [vmem:[%s212 + $0x8] sm:$0xff]
      %v256 = vld [vmem:[%s212 + $0x10] sm:$0xff]
      %v257 = vld [vmem:[%s212 + $0x18] sm:$0xff]
      %v258 = vadd.f32 %v250, %v254
      %v259 = vadd.f32 %v251, %v255
      %v260 = vadd.f32 %v252, %v256
      %v261 = vadd.f32 %v253, %v257
      %v262 = vmax.f32 %v258, 0.0
      %v263 = vmax.f32 %v259, 0.0
      %v264 = vmax.f32 %v260, 0.0
      %v265 = vmax.f32 %v261, 0.0
      %266 = vst [vmem:[%s217] sm:$0xff] %v262
      %267 = vst [vmem:[%s217 + $0x8] sm:$0xff] %v263
      %268 = vst [vmem:[%s217 + $0x10] sm:$0xff] %v264
      %269 = vst [vmem:[%s217 + $0x18] sm:$0xff] %v265
      %p270 = scmp.lt.s32.totalorder %s15, 1
      %s271 = scalar_select %p270, %s15, 1
      %s272 = smul.addr %s271, 4
      %s273 = smul.addr %s272, 8
      %s274 = scalar_lea.vmem %s4, %s273
      // Predicated region
      $region37: #{block_forward.7} parent=35 // pred_check
        %p275 = pneg %p127
      $region38: #{block_forward.7} parent=35 // pred_check_branch
        %277 = sbr.rel (%p275) target = $region40
      $region39: #{block_forward.7} parent=35 // pred_region
        _
      $region40: #{block_forward.7} parent=35 // pred_fallthru
        _
    $region36: #{block_forward.7} parent=5 // pred_fallthru
      _
    %p278 = scmp.le.s32.totalorder 2, %s10
    // Predicated region
    $region41: #{block_forward.7} parent=5 // pred_check
      %p279 = pneg %p278
    $region42: #{block_forward.7} parent=5 // pred_check_branch
      %281 = sbr.rel (%p279) target = $region44
    $region43: #{block_forward.7} parent=5 // pred_region
      %s282 = ssub.s32 %s10, 2
      // Predicated region
      $region45: #{block_forward.7} parent=43 // pred_check
        %p283 = pneg %p133
      $region46: #{block_forward.7} parent=43 // pred_check_branch
        %285 = sbr.rel (%p283) target = $region48
      $region47: #{block_forward.7} parent=43 // pred_region
        %p286 = scmp.lt.s32.totalorder %s16, 1
        %s287 = scalar_select %p286, %s16, 1
        %s288 = smul.addr %s287, 4
        %s289 = smul.addr %s288, 8
        %s290 = scalar_lea.vmem %s4, %s289
      $region48: #{block_forward.7} parent=43 // pred_fallthru
        _
    $region44: #{block_forward.7} parent=5 // pred_fallthru
      _
  $region6: #{block_forward.7} parent=0 // loop_footer
    %s14 = sadd.s32 1, %s10
  $region7: #{block_forward.7} parent=0 // loop_footer_branch
    %9 = sbr.rel target = $region3
  $region8: #{block_forward.7} parent=0 // loop_exit
    _

</llo_original>
